<compile_context>
chip_gen: v7x
topology: tpu7x:2x2x1
jax: 0.10.0
libtpu: 0.0.40
codegen_flags: <defaults>
</compile_context>

<pallas_src>
import math
from functools import partial

import jax
import jax.numpy as jnp
from jax import lax
from jax.experimental import pallas as pl
from jax.experimental.pallas import tpu as pltpu


# ----------------------------- TPU / VMEM configuration -----------------------------

_CompilerParams = getattr(pltpu, "CompilerParams", None) or getattr(pltpu, "TPUCompilerParams")


def _vmem_capacity_bytes():
    try:
        info = pltpu.get_tpu_info()
        cap = getattr(info, "vmem_capacity_bytes", None)
        if cap:
            return int(cap)
    except Exception:
        pass
    return 64 * 1024 * 1024  # conservative default (v7x per-TC VMEM)


_VMEM_CAP = _vmem_capacity_bytes()
_VMEM_LIMIT = int(0.75 * _VMEM_CAP)   # headroom for in-kernel f32 temporaries (v7x)


def _compiler_params(n_axes):
    return _CompilerParams(
        dimension_semantics=("parallel",) * n_axes,
        vmem_limit_bytes=_VMEM_LIMIT,
    )


# ----------------------------- fused conv kernel -----------------------------

def _conv_kernel(*refs, kh, kw, pad, ho, wo, act, pool, phase, has_skip, has_res):
    # refs: x1, [x2], w1, [w2], scale, shift, [res], out(s)..., pad_scratch(es)...
    n_out = 2 if pool == "both" else 1
    n_scr = 2 if has_skip else 1
    n_in = len(refs) - n_out - n_scr
    ins, outs, scrs = refs[:n_in], refs[n_in:n_in + n_out], refs[n_in + n_out:]

    idx = 0
    x1_ref = ins[idx]; idx += 1
    x2_ref = None
    if has_skip:
        x2_ref = ins[idx]; idx += 1
    w1_ref = ins[idx]; idx += 1
    w2_ref = None
    if has_skip:
        w2_ref = ins[idx]; idx += 1
    s_ref = ins[idx]; idx += 1
    t_ref = ins[idx]; idx += 1
    r_ref = ins[idx] if has_res else None

    (pt, _pb), (pleft, _pr) = pad

    def im2col(x_ref, pad_ref):
        # Zero-fill the padded-window scratch, copy the image into its interior,
        # then gather the kh*kw taps into one (ho*wo, kh*kw*cin) patch so the whole
        # conv is a single MXU matmul with K = kh*kw*cin.
        _, h, w, c = x_ref.shape
        pad_ref[...] = jnp.zeros(pad_ref.shape, pad_ref.dtype)
        pad_ref[pt:pt + h, pleft:pleft + w, :] = x_ref[0]
        cols = [pad_ref[ky:ky + ho, kx:kx + wo, :].reshape(ho * wo, c)
                for ky in range(kh) for kx in range(kw)]
        return cols[0] if len(cols) == 1 else jnp.concatenate(cols, axis=-1)

    patch = im2col(x1_ref, scrs[0])
    acc = jnp.dot(patch, w1_ref[...], preferred_element_type=jnp.float32)
    if has_skip:                                     # fused skip-connection concat
        patch2 = im2col(x2_ref, scrs[1])
        acc = acc + jnp.dot(patch2, w2_ref[...], preferred_element_type=jnp.float32)

    y = acc * s_ref[...] + t_ref[...]                # folded BatchNorm (+ conv bias)
    if has_res:                                      # fused residual add (bottleneck)
        y = y + r_ref[0].reshape(ho * wo, y.shape[-1]).astype(jnp.float32)
    if act == "relu":
        y = jnp.maximum(y, 0.0)
    elif act == "sigmoid":
        y = 1.0 / (1.0 + jnp.exp(-y))                # exact sigmoid (output layer only)

    if phase:
        # Merged ConvTranspose: y channels are [u0v0 | u0v1 | u1v0 | u1v1] groups.
        # Store as (ho, 2, wo, 2C) so the host-side upsample reshape is free.
        o_ref = outs[0]
        half = o_ref.shape[-1]                       # = 2*C
        yr = y.reshape(ho, wo, 2 * half)
        o_ref[0] = jnp.stack([yr[:, :, :half], yr[:, :, half:]], axis=1).astype(o_ref.dtype)
        return

    c = y.shape[-1]
    if pool is None:
        outs[0][0] = y.reshape(ho, wo, c).astype(outs[0].dtype)
        return
    # Fused AvgPool2d(2) on the f32 accumulator.
    y5 = y.reshape(ho // 2, 2, wo // 2, 2, c)
    pooled = 0.25 * (y5[:, 0, :, 0, :] + y5[:, 0, :, 1, :]
                     + y5[:, 1, :, 0, :] + y5[:, 1, :, 1, :])
    if pool == "both":
        outs[0][0] = y.reshape(ho, wo, c).astype(outs[0].dtype)
        outs[1][0] = pooled.astype(outs[1].dtype)
    else:  # "fused"
        outs[0][0] = pooled.astype(outs[0].dtype)


def fused_conv(x, w, scale, shift, *, kh, kw, pad, act="relu", x2=None, w2=None,
               residual=None, pool=None, phase=False, out_dtype=jnp.bfloat16,
               cout_tile=None):
    """Conv2d(stride=1) + folded BN [+ residual | + second (skip) input] + activation
    [+ fused 2x2 avg-pool | + fused deconv phase interleave], NHWC.
    w: (kh*kw*Cin, Cout) bf16 (K-folded weight)."""
    n, h, win, c1 = x.shape
    cout = w.shape[-1]
    (pt, pb), (pleft, pright) = pad
    hp, wp = h + pt + pb, win + pleft + pright
    ho, wo = hp - kh + 1, wp - kw + 1
    assert w.shape[0] == kh * kw * c1
    if pool:
        assert ho % 2 == 0 and wo % 2 == 0

    has_skip = x2 is not None
    has_res = residual is not None

    if cout_tile is not None and not phase and cout % cout_tile == 0:
        tco = min(cout, cout_tile)
    else:
        tco = cout
    nco = cout // tco

    in_specs = [pl.BlockSpec((1, h, win, c1), lambda b, j: (b, 0, 0, 0))]
    args = [x.astype(jnp.bfloat16)]
    scratch = [pltpu.VMEM((hp, wp, c1), jnp.bfloat16)]
    if has_skip:
        c2 = x2.shape[-1]
        assert w2 is not None and w2.shape[0] == kh * kw * c2
        in_specs.append(pl.BlockSpec((1, h, win, c2), lambda b, j: (b, 0, 0, 0)))
        args.append(x2.astype(jnp.bfloat16))
        scratch.append(pltpu.VMEM((hp, wp, c2), jnp.bfloat16))
    in_specs.append(pl.BlockSpec((kh * kw * c1, tco), lambda b, j: (0, j)))
    args.append(w)
    if has_skip:
        in_specs.append(pl.BlockSpec((kh * kw * c2, tco), lambda b, j: (0, j)))
        args.append(w2)
    in_specs += [pl.BlockSpec((1, tco), lambda b, j: (0, j)),
                 pl.BlockSpec((1, tco), lambda b, j: (0, j))]
    args += [scale.reshape(1, cout).astype(jnp.float32),
             shift.reshape(1, cout).astype(jnp.float32)]
    if has_res:
        in_specs.append(pl.BlockSpec((1, ho, wo, tco), lambda b, j: (b, 0, 0, j)))
        args.append(residual.astype(jnp.bfloat16))

    if phase:
        assert kh == 2 and kw == 2 and cout % 4 == 0
        c = cout // 4
        out_shape = jax.ShapeDtypeStruct((n, ho, 2, wo, 2 * c), out_dtype)
        out_specs = pl.BlockSpec((1, ho, 2, wo, 2 * c), lambda b, j: (b, 0, 0, 0, 0))
    elif pool == "fused":
        out_shape = jax.ShapeDtypeStruct((n, ho // 2, wo // 2, cout), out_dtype)
        out_specs = pl.BlockSpec((1, ho // 2, wo // 2, tco), lambda b, j: (b, 0, 0, j))
    elif pool == "both":
        out_shape = (jax.ShapeDtypeStruct((n, ho, wo, cout), out_dtype),
                     jax.ShapeDtypeStruct((n, ho // 2, wo // 2, cout), out_dtype))
        out_specs = (pl.BlockSpec((1, ho, wo, tco), lambda b, j: (b, 0, 0, j)),
                     pl.BlockSpec((1, ho // 2, wo // 2, tco), lambda b, j: (b, 0, 0, j)))
    else:
        out_shape = jax.ShapeDtypeStruct((n, ho, wo, cout), out_dtype)
        out_specs = pl.BlockSpec((1, ho, wo, tco), lambda b, j: (b, 0, 0, j))

    # TODO(synk): large-resolution inputs would need a row-tiled variant (overlapping
    # Element-indexed windows or manual DMA) instead of whole-image VMEM tiles.
    return pl.pallas_call(
        partial(_conv_kernel, kh=kh, kw=kw, pad=pad, ho=ho, wo=wo, act=act,
                pool=pool, phase=phase, has_skip=has_skip, has_res=has_res),
        grid=(n, nco),
        out_shape=out_shape,
        in_specs=in_specs,
        out_specs=out_specs,
        scratch_shapes=scratch,
        compiler_params=_compiler_params(2),
    )(*args)


# ----------------------------- parameter construction -----------------------------

def _conv_bn_layer(kg, kh, kw, cin, cout, with_bn=True, eps=1e-5):
    w = jax.random.normal(kg(), (kh, kw, cin, cout), jnp.float32) / math.sqrt(kh * kw * cin)
    b = 0.01 * jax.random.normal(kg(), (cout,), jnp.float32)
    if with_bn:
        gamma = 1.0 + 0.1 * jax.random.normal(kg(), (cout,), jnp.float32)
        beta = 0.1 * jax.random.normal(kg(), (cout,), jnp.float32)
        mean = jnp.zeros((cout,), jnp.float32)   # inference-mode running stats
        var = jnp.ones((cout,), jnp.float32)
        scale = gamma / jnp.sqrt(var + eps)
        shift = scale * (b - mean) + beta
    else:
        scale = jnp.ones((cout,), jnp.float32)
        shift = b
    return w, scale, shift


def _pack_conv(w, scale, shift):
    kh, kw, cin, cout = w.shape
    return {"w": w.reshape(kh * kw * cin, cout).astype(jnp.bfloat16),
            "scale": scale.reshape(1, cout).astype(jnp.float32),
            "shift": shift.reshape(1, cout).astype(jnp.float32)}


def _pack_skip_conv(w, scale, shift, c_first):
    # Split the conv weight over the concat inputs: first c_first input channels go
    # to "w" (applied to the skip tensor), the rest to "w2" (applied to x).
    kh, kw, cin, cout = w.shape
    p = _pack_conv(w[:, :, :c_first, :], scale, shift)
    p["w2"] = w[:, :, c_first:, :].reshape(kh * kw * (cin - c_first), cout).astype(jnp.bfloat16)
    return p


def _merge_deconv_weight(wc):
    """ConvTranspose2d(k=3,s=2,p=1,op=1) as a single 2x2 conv with 4*Cout phase channels.
    wc: (3,3,Cin,Cout) kernel in the equivalent-conv layout (dilation formulation)."""
    cin, cout = wc.shape[2], wc.shape[3]
    z = jnp.zeros((cin, cout), wc.dtype)
    # merged tap (u,v) over x padded (0,1) bottom/right; phases ordered (0,0),(0,1),(1,0),(1,1)
    taps = {
        (0, 0): [wc[1, 1], wc[1, 0], wc[0, 1], wc[0, 0]],
        (0, 1): [z,        wc[1, 2], z,        wc[0, 2]],
        (1, 0): [z,        z,        wc[2, 1], wc[2, 0]],
        (1, 1): [z,        z,        z,        wc[2, 2]],
    }
    return jnp.stack([jnp.concatenate(taps[(u, v)], axis=-1)
                      for u in range(2) for v in range(2)], axis=0)   # (4, cin, 4*cout)


def _pack_deconv(wc, scale, shift):
    cin, cout = wc.shape[2], wc.shape[3]
    taps = _merge_deconv_weight(wc)                                    # tap-major order
    return {"w": taps.reshape(4 * cin, 4 * cout).astype(jnp.bfloat16),
            "scale": jnp.tile(scale, 4).reshape(1, 4 * cout).astype(jnp.float32),
            "shift": jnp.tile(shift, 4).reshape(1, 4 * cout).astype(jnp.float32)}


def _pack_out_conv(w, scale, shift, lane_pad=128):
    # Pad Cout to a multiple of 128 so the final store is lane-dense (unmasked).
    kh, kw, cin, cout = w.shape
    cp = max(lane_pad, ((cout + 127) // 128) * 128)
    w = jnp.pad(w, ((0, 0), (0, 0), (0, 0), (0, cp - cout)))
    scale = jnp.pad(scale, (0, cp - cout), constant_values=1.0)
    shift = jnp.pad(shift, (0, cp - cout))
    return _pack_conv(w, scale, shift)


def init_mask_net_params(in_channel, out_channel, seed=0):
    key = [jax.random.PRNGKey(seed)]

    def kg():
        key[0], sub = jax.random.split(key[0])
        return sub

    P = {}

    def conv(name, k, cin, cout, with_bn=True):
        w, s, t = _conv_bn_layer(kg, k, k, cin, cout, with_bn)
        P[name] = _pack_conv(w, s, t)

    def skip_conv(name, cin, c_first, cout):
        w, s, t = _conv_bn_layer(kg, 3, 3, cin, cout, True)
        P[name] = _pack_skip_conv(w, s, t, c_first)

    def deconv(name, cin, cout):
        w, s, t = _conv_bn_layer(kg, 3, 3, cin, cout, True)
        P[name] = _pack_deconv(w, s, t)

    conv("input_adapt", 7, in_channel, 32)
    conv("enc1_1", 3, 32, 32); conv("enc1_2", 3, 32, 32)
    conv("enc2_1", 3, 32, 64); conv("enc2_2", 3, 64, 64)
    conv("enc3_1", 3, 64, 128); conv("enc3_2", 3, 128, 128)
    conv("enc4_1", 3, 128, 256); conv("enc4_2", 3, 256, 256); conv("enc4_3", 3, 256, 256)
    # Res_Bottleneck(256, 512, 512)
    conv("bot_res1", 3, 256, 512); conv("bot_c1", 3, 256, 512); conv("bot_c2", 3, 512, 512)
    conv("bot_res2", 3, 512, 512); conv("bot_c3", 3, 512, 512); conv("bot_c4", 3, 512, 512)
    deconv("up4", 512, 256)
    conv("link4", 3, 256, 256)
    skip_conv("dec4_1", 512, 256, 256)                     # concat([encode4, x])
    conv("dec4_2", 3, 256, 256); conv("dec4_3", 3, 256, 256)
    deconv("up3", 256, 128)
    conv("link3_1", 3, 128, 128); conv("link3_2", 3, 128, 128)
    skip_conv("dec3_1", 256, 128, 128)                     # concat([link3(x), x])
    conv("dec3_2", 3, 128, 64)
    deconv("up2", 64, 64)
    conv("dec2_1", 3, 64, 64); conv("dec2_2", 3, 64, 32)
    deconv("up1", 32, 32)
    conv("dec1_1", 3, 32, 32); conv("dec1_2", 3, 32, 32)
    w, s, t = _conv_bn_layer(kg, 3, 3, 32, out_channel, with_bn=False)
    P["out"] = _pack_out_conv(w, s, t)
    return P


# ----------------------------- forward pass -----------------------------

def mask_net_forward(x_nchw, P, out_channel):
    x = jnp.transpose(x_nchw, (0, 2, 3, 1)).astype(jnp.bfloat16)   # NCHW -> NHWC, bf16

    def cb(name, h, act="relu", residual=None, pool=None, x2=None,
           out_dtype=jnp.bfloat16):
        p = P[name]
        cin = h.shape[-1]
        k = int(math.isqrt(p["w"].shape[0] // cin))        # square kernels (3 or 7)
        pd = (((k - 1) // 2, (k - 1) // 2), ((k - 1) // 2, (k - 1) // 2))
        cout = p["w"].shape[-1]
        return fused_conv(h, p["w"], p["scale"], p["shift"], kh=k, kw=k, pad=pd,
                          act=act, x2=x2, w2=p.get("w2"), residual=residual,
                          pool=pool, out_dtype=out_dtype,
                          cout_tile=256 if cout >= 512 else None)

    def up(name, h):
        # phase-merged ConvTranspose2d(k=3,s=2,p=1,op=1) + BN + ReLU; the phase
        # interleave is done in the kernel's stores so this reshape is free.
        p = P[name]
        y = fused_conv(h, p["w"], p["scale"], p["shift"], kh=2, kw=2,
                       pad=((0, 1), (0, 1)), act="relu", phase=True)
        n_, ho, _, wo, c2 = y.shape
        return y.reshape(n_, 2 * ho, 2 * wo, c2 // 2)

    # encoder (pooling fused into the last conv of each stage)
    x = cb("input_adapt", x)
    x = cb("enc1_1", x)
    x = cb("enc1_2", x, pool="fused")
    x = cb("enc2_1", x)
    x = cb("enc2_2", x, pool="fused")
    x = cb("enc3_1", x)
    x = cb("enc3_2", x, pool="fused")        # unpooled encode3 is never used (link_3 acts on upsampled x)
    x = cb("enc4_1", x)
    x = cb("enc4_2", x)
    encode4, x = cb("enc4_3", x, pool="both")   # Dropout2d(0.3): identity in eval

    # Res_Bottleneck (Dropout2d(0.5): identity); residual add + ReLU fused in epilogue
    sc = cb("bot_res1", x, act="none")
    x = cb("bot_c1", x)
    x = cb("bot_c2", x, act="relu", residual=sc)
    sc = cb("bot_res2", x, act="none")
    x = cb("bot_c3", x)
    x = cb("bot_c4", x, act="relu", residual=sc)

    # decoder (skip concat fused as dual-input convs)
    x = up("up4", x)
    encode4 = cb("link4", encode4)
    x = cb("dec4_1", encode4, x2=x)          # torch.concat((encode4, x), dim=1) fused
    x = cb("dec4_2", x)
    x = cb("dec4_3", x)                      # Dropout2d(0.3): identity
    x = up("up3", x)
    lnk = cb("link3_2", cb("link3_1", x))    # PyTorch applies link_3 to the upsampled x
    x = cb("dec3_1", lnk, x2=x)              # torch.concat((link3(x), x), dim=1) fused
    x = cb("dec3_2", x)
    x = up("up2", x)
    x = cb("dec2_1", x)
    x = cb("dec2_2", x)
    x = up("up1", x)
    x = cb("dec1_1", x)
    x = cb("dec1_2", x)
    y = cb("out", x, act="sigmoid", out_dtype=jnp.float32)[..., :out_channel]
    return jnp.transpose(y, (0, 3, 1, 2))    # NHWC -> NCHW


# ----------------------------- references for self-checks -----------------------------

def _reference_conv(x, w, scale, shift, pad, act, residual=None, pool=False):
    xf = x.astype(jnp.bfloat16).astype(jnp.float32)
    wf = w.astype(jnp.bfloat16).astype(jnp.float32)
    y = lax.conv_general_dilated(xf, wf, (1, 1), (tuple(pad[0]), tuple(pad[1])),
                                 dimension_numbers=("NHWC", "HWIO", "NHWC"),
                                 precision=lax.Precision.HIGHEST)
    y = y * scale.reshape(1, 1, 1, -1) + shift.reshape(1, 1, 1, -1)
    if residual is not None:
        y = y + residual.astype(jnp.float32)
    if act == "relu":
        y = jnp.maximum(y, 0.0)
    if pool:
        n, h, w_, c = y.shape
        y = y.reshape(n, h // 2, 2, w_ // 2, 2, c).mean(axis=(2, 4))
    return y


def _reference_deconv(x, wc, scale, shift):
    n, h, w, c = x.shape
    xf = x.astype(jnp.bfloat16).astype(jnp.float32)
    wf = wc.astype(jnp.bfloat16).astype(jnp.float32)
    xd = jnp.zeros((n, 2 * h - 1, 2 * w - 1, c), jnp.float32).at[:, ::2, ::2, :].set(xf)
    xd = jnp.pad(xd, ((0, 0), (1, 2), (1, 2), (0, 0)))
    y = lax.conv_general_dilated(xd, wf, (1, 1), "VALID",
                                 dimension_numbers=("NHWC", "HWIO", "NHWC"),
                                 precision=lax.Precision.HIGHEST)
    return jnp.maximum(y * scale.reshape(1, 1, 1, -1) + shift.reshape(1, 1, 1, -1), 0.0)


# ----------------------------- demo -----------------------------

if __name__ == "__main__":
    IN_CH, OUT_CH = 4, 1
    N, H, W = 2, 16, 16   # H, W must be divisible by 16 (4 avg-pools)

    key = jax.random.PRNGKey(0)
    k1, k2, k3, k4, k5, k6, k7 = jax.random.split(key, 7)

    # (a) fused K-folded conv + BN + residual + ReLU, exercising the Cout-split grid
    xa = jax.random.normal(k1, (2, 8, 8, 16), jnp.float32)
    wa = 0.2 * jax.random.normal(k2, (3, 3, 16, 256), jnp.float32)
    sa = 1.0 + 0.1 * jax.random.normal(k3, (256,), jnp.float32)
    ta = 0.1 * jax.random.normal(k4, (256,), jnp.float32)
    ra = jax.random.normal(k5, (2, 8, 8, 256), jnp.float32).astype(jnp.bfloat16)
    got = fused_conv(xa, wa.reshape(9 * 16, 256).astype(jnp.bfloat16), sa, ta,
                     kh=3, kw=3, pad=((1, 1), (1, 1)), act="relu",
                     residual=ra, out_dtype=jnp.float32, cout_tile=128)
    ref = _reference_conv(xa, wa, sa, ta, ((1, 1), (1, 1)), "relu", residual=ra)
    assert float(jnp.max(jnp.abs(got - ref))) < 5e-2, "conv+bn+res mismatch"

    # (b) phase-merged transposed conv with in-kernel phase interleave
    xb = jax.random.normal(k6, (1, 5, 6, 8), jnp.float32)
    wb = 0.2 * jax.random.normal(k2, (3, 3, 8, 16), jnp.float32)
    sb, tb = sa[:16], ta[:16]
    taps_b = _merge_deconv_weight(wb).reshape(4 * 8, 4 * 16).astype(jnp.bfloat16)
    got = fused_conv(xb, taps_b, jnp.tile(sb, 4), jnp.tile(tb, 4), kh=2, kw=2,
                     pad=((0, 1), (0, 1)), act="relu", phase=True, out_dtype=jnp.float32)
    n_, ho_, _, wo_, c2_ = got.shape
    got = got.reshape(n_, 2 * ho_, 2 * wo_, c2_ // 2)
    ref = _reference_deconv(xb, wb, sb, tb)
    assert float(jnp.max(jnp.abs(got - ref))) < 5e-2, "deconv mismatch"

    # (c) fused avg-pool epilogue
    xc = jax.random.normal(k3, (2, 8, 12, 32), jnp.float32)
    wc_ = 0.2 * jax.random.normal(k4, (3, 3, 32, 64), jnp.float32)
    sc_ = 1.0 + 0.1 * jax.random.normal(k5, (64,), jnp.float32)
    tc_ = 0.1 * jax.random.normal(k6, (64,), jnp.float32)
    got = fused_conv(xc, wc_.reshape(9 * 32, 64).astype(jnp.bfloat16), sc_, tc_,
                     kh=3, kw=3, pad=((1, 1), (1, 1)), act="relu", pool="fused",
                     out_dtype=jnp.float32)
    ref = _reference_conv(xc, wc_, sc_, tc_, ((1, 1), (1, 1)), "relu", pool=True)
    assert float(jnp.max(jnp.abs(got - ref))) < 5e-2, "conv+pool mismatch"

    # (d) fused skip-connection concat (dual-input conv)
    xd1 = jax.random.normal(k1, (2, 6, 6, 16), jnp.float32)
    xd2 = jax.random.normal(k7, (2, 6, 6, 24), jnp.float32)
    wd = 0.2 * jax.random.normal(k2, (3, 3, 40, 32), jnp.float32)
    sd = 1.0 + 0.1 * jax.random.normal(k3, (32,), jnp.float32)
    td = 0.1 * jax.random.normal(k4, (32,), jnp.float32)
    got = fused_conv(xd1, wd[:, :, :16, :].reshape(9 * 16, 32).astype(jnp.bfloat16),
                     sd, td, kh=3, kw=3, pad=((1, 1), (1, 1)), act="relu",
                     x2=xd2, w2=wd[:, :, 16:, :].reshape(9 * 24, 32).astype(jnp.bfloat16),
                     out_dtype=jnp.float32)
    ref = _reference_conv(jnp.concatenate([xd1, xd2], axis=-1), wd, sd, td,
                          ((1, 1), (1, 1)), "relu")
    assert float(jnp.max(jnp.abs(got - ref))) < 5e-2, "skip concat mismatch"

    # full network
    params = init_mask_net_params(IN_CH, OUT_CH, seed=0)
    xin = jax.random.normal(jax.random.PRNGKey(0), (N, IN_CH, H, W), jnp.float32)
    fwd = jax.jit(partial(mask_net_forward, out_channel=OUT_CH))
    y = jax.block_until_ready(fwd(xin, params))

    assert y.shape == (N, OUT_CH, H, W), y.shape
    assert bool(jnp.all(jnp.isfinite(y)))
    assert bool(jnp.all((y >= 0.0) & (y <= 1.0)))   # exact sigmoid output range
    print("KERNEL_OK")
</pallas_src>

<mosaic_0001>
module attributes {stable_mosaic.version = 11 : i64} {
  func.func @_conv_kernel(%arg0: i32, %arg1: i32, %arg2: memref<1x8x8x16xbf16, #tpu.memory_space<vmem>>, %arg3: memref<144x128xbf16, #tpu.memory_space<vmem>>, %arg4: memref<1x128xf32, #tpu.memory_space<vmem>>, %arg5: memref<1x128xf32, #tpu.memory_space<vmem>>, %arg6: memref<1x8x8x128xbf16, #tpu.memory_space<vmem>>, %arg7: memref<1x8x8x128xf32, #tpu.memory_space<vmem>>, %arg8: memref<10x10x16xbf16, #tpu.memory_space<vmem>>) attributes {dimension_semantics = [#tpu.dimension_semantics<parallel>, #tpu.dimension_semantics<parallel>], iteration_bounds = array<i64: 2, 2>, scalar_prefetch = 0 : i64, scratch_operands = 1 : i64, tpu.core_type = #tpu.core_type<tc>, window_params = [{transform_indices = @transform_0, window_bounds = array<i64: 1, 8, 8, 16>}, {transform_indices = @transform_1, window_bounds = array<i64: 144, 128>}, {transform_indices = @transform_2, window_bounds = array<i64: 1, 128>}, {transform_indices = @transform_3, window_bounds = array<i64: 1, 128>}, {transform_indices = @transform_4, window_bounds = array<i64: 1, 8, 8, 128>}, {transform_indices = @transform_5, window_bounds = array<i64: 1, 8, 8, 128>}]} {
    %cst = arith.constant 0.000000e+00 : bf16
    %0 = vector.broadcast %cst : bf16 to vector<10x10x16xbf16>
    %c0 = arith.constant 0 : index
    %c0_0 = arith.constant 0 : index
    %c0_1 = arith.constant 0 : index
    %1 = vector.load %arg8[%c0, %c0_0, %c0_1] : memref<10x10x16xbf16, #tpu.memory_space<vmem>>, vector<10x10x16xbf16>
    tpu.vector_store %arg8[%c0, %c0_0, %c0_1], %0 {strides = array<i32>} : memref<10x10x16xbf16, #tpu.memory_space<vmem>>, vector<10x10x16xbf16>,
    %c0_2 = arith.constant 0 : index
    %c0_3 = arith.constant 0 : index
    %c0_4 = arith.constant 0 : index
    %c0_5 = arith.constant 0 : index
    %2 = vector.load %arg2[%c0_2, %c0_3, %c0_4, %c0_5] : memref<1x8x8x16xbf16, #tpu.memory_space<vmem>>, vector<1x8x8x16xbf16>
    %3 = vector.shape_cast %2 : vector<1x8x8x16xbf16> to vector<8x8x16xbf16>
    %c1 = arith.constant 1 : index
    %c1_6 = arith.constant 1 : index
    %c0_7 = arith.constant 0 : index
    %4 = vector.load %arg8[%c1, %c1_6, %c0_7] : memref<10x10x16xbf16, #tpu.memory_space<vmem>>, vector<8x8x16xbf16>
    tpu.vector_store %arg8[%c1, %c1_6, %c0_7], %3 {strides = array<i32>} : memref<10x10x16xbf16, #tpu.memory_space<vmem>>, vector<8x8x16xbf16>,
    %c0_8 = arith.constant 0 : index
    %c0_9 = arith.constant 0 : index
    %c0_10 = arith.constant 0 : index
    %5 = vector.load %arg8[%c0_8, %c0_9, %c0_10] : memref<10x10x16xbf16, #tpu.memory_space<vmem>>, vector<8x8x16xbf16>
    %6 = vector.shape_cast %5 : vector<8x8x16xbf16> to vector<64x16xbf16>
    %c0_11 = arith.constant 0 : index
    %c1_12 = arith.constant 1 : index
    %c0_13 = arith.constant 0 : index
    %7 = vector.load %arg8[%c0_11, %c1_12, %c0_13] : memref<10x10x16xbf16, #tpu.memory_space<vmem>>, vector<8x8x16xbf16>
    %8 = vector.shape_cast %7 : vector<8x8x16xbf16> to vector<64x16xbf16>
    %c0_14 = arith.constant 0 : index
    %c2 = arith.constant 2 : index
    %c0_15 = arith.constant 0 : index
    %9 = vector.load %arg8[%c0_14, %c2, %c0_15] : memref<10x10x16xbf16, #tpu.memory_space<vmem>>, vector<8x8x16xbf16>
    %10 = vector.shape_cast %9 : vector<8x8x16xbf16> to vector<64x16xbf16>
    %c1_16 = arith.constant 1 : index
    %c0_17 = arith.constant 0 : index
    %c0_18 = arith.constant 0 : index
    %11 = vector.load %arg8[%c1_16, %c0_17, %c0_18] : memref<10x10x16xbf16, #tpu.memory_space<vmem>>, vector<8x8x16xbf16>
    %12 = vector.shape_cast %11 : vector<8x8x16xbf16> to vector<64x16xbf16>
    %c1_19 = arith.constant 1 : index
    %c1_20 = arith.constant 1 : index
    %c0_21 = arith.constant 0 : index
    %13 = vector.load %arg8[%c1_19, %c1_20, %c0_21] : memref<10x10x16xbf16, #tpu.memory_space<vmem>>, vector<8x8x16xbf16>
    %14 = vector.shape_cast %13 : vector<8x8x16xbf16> to vector<64x16xbf16>
    %c1_22 = arith.constant 1 : index
    %c2_23 = arith.constant 2 : index
    %c0_24 = arith.constant 0 : index
    %15 = vector.load %arg8[%c1_22, %c2_23, %c0_24] : memref<10x10x16xbf16, #tpu.memory_space<vmem>>, vector<8x8x16xbf16>
    %16 = vector.shape_cast %15 : vector<8x8x16xbf16> to vector<64x16xbf16>
    %c2_25 = arith.constant 2 : index
    %c0_26 = arith.constant 0 : index
    %c0_27 = arith.constant 0 : index
    %17 = vector.load %arg8[%c2_25, %c0_26, %c0_27] : memref<10x10x16xbf16, #tpu.memory_space<vmem>>, vector<8x8x16xbf16>
    %18 = vector.shape_cast %17 : vector<8x8x16xbf16> to vector<64x16xbf16>
    %c2_28 = arith.constant 2 : index
    %c1_29 = arith.constant 1 : index
    %c0_30 = arith.constant 0 : index
    %19 = vector.load %arg8[%c2_28, %c1_29, %c0_30] : memref<10x10x16xbf16, #tpu.memory_space<vmem>>, vector<8x8x16xbf16>
    %20 = vector.shape_cast %19 : vector<8x8x16xbf16> to vector<64x16xbf16>
    %c2_31 = arith.constant 2 : index
    %c2_32 = arith.constant 2 : index
    %c0_33 = arith.constant 0 : index
    %21 = vector.load %arg8[%c2_31, %c2_32, %c0_33] : memref<10x10x16xbf16, #tpu.memory_space<vmem>>, vector<8x8x16xbf16>
    %22 = vector.shape_cast %21 : vector<8x8x16xbf16> to vector<64x16xbf16>
    %23 = tpu.concatenate %6, %8, %10, %12, %14, %16, %18, %20, %22 in 1 : vector<64x16xbf16>, vector<64x16xbf16>, vector<64x16xbf16>, vector<64x16xbf16>, vector<64x16xbf16>, vector<64x16xbf16>, vector<64x16xbf16>, vector<64x16xbf16>, vector<64x16xbf16> -> vector<64x144xbf16>
    %c0_34 = arith.constant 0 : index
    %c0_35 = arith.constant 0 : index
    %24 = vector.load %arg3[%c0_34, %c0_35] : memref<144x128xbf16, #tpu.memory_space<vmem>>, vector<144x128xbf16>
    %cst_36 = arith.constant dense<0.000000e+00> : vector<64x128xf32>
    %25 = tpu.matmul %23, %24, %cst_36 {dimension_numbers = #tpu.dot_dimension_numbers<[1], [0], [0], [1], [0, 0, 1, 1], [], []>} : vector<64x144xbf16>, vector<144x128xbf16>, vector<64x128xf32> -> vector<64x128xf32>
    %c0_37 = arith.constant 0 : index
    %c0_38 = arith.constant 0 : index
    %26 = vector.load %arg4[%c0_37, %c0_38] : memref<1x128xf32, #tpu.memory_space<vmem>>, vector<1x128xf32>
    %27 = vector.broadcast %26 : vector<1x128xf32> to vector<64x128xf32>
    %28 = arith.mulf %25, %27 : vector<64x128xf32>
    %c0_39 = arith.constant 0 : index
    %c0_40 = arith.constant 0 : index
    %29 = vector.load %arg5[%c0_39, %c0_40] : memref<1x128xf32, #tpu.memory_space<vmem>>, vector<1x128xf32>
    %30 = vector.broadcast %29 : vector<1x128xf32> to vector<64x128xf32>
    %31 = arith.addf %28, %30 : vector<64x128xf32>
    %c0_41 = arith.constant 0 : index
    %c0_42 = arith.constant 0 : index
    %c0_43 = arith.constant 0 : index
    %c0_44 = arith.constant 0 : index
    %32 = vector.load %arg6[%c0_41, %c0_42, %c0_43, %c0_44] : memref<1x8x8x128xbf16, #tpu.memory_space<vmem>>, vector<1x8x8x128xbf16>
    %33 = vector.shape_cast %32 : vector<1x8x8x128xbf16> to vector<8x8x128xbf16>
    %34 = vector.shape_cast %33 : vector<8x8x128xbf16> to vector<64x128xbf16>
    %35 = arith.extf %34 : vector<64x128xbf16> to vector<64x128xf32>
    %36 = arith.addf %31, %35 : vector<64x128xf32>
    %cst_45 = arith.constant 0.000000e+00 : f32
    %37 = vector.broadcast %cst_45 : f32 to vector<64x128xf32>
    %38 = arith.maximumf %36, %37 : vector<64x128xf32>
    %39 = vector.shape_cast %38 : vector<64x128xf32> to vector<8x8x128xf32>
    %c0_46 = arith.constant 0 : index
    %c0_47 = arith.constant 0 : index
    %c0_48 = arith.constant 0 : index
    %c0_49 = arith.constant 0 : index
    %40 = vector.load %arg7[%c0_46, %c0_47, %c0_48, %c0_49] : memref<1x8x8x128xf32, #tpu.memory_space<vmem>>, vector<1x8x8x128xf32>
    %41 = vector.shape_cast %40 : vector<1x8x8x128xf32> to vector<8x8x128xf32>
    %42 = vector.shape_cast %39 : vector<8x8x128xf32> to vector<1x8x8x128xf32>
    tpu.vector_store %arg7[%c0_46, %c0_47, %c0_48, %c0_49], %42 {strides = array<i32>} : memref<1x8x8x128xf32, #tpu.memory_space<vmem>>, vector<1x8x8x128xf32>,
    return
  }
  func.func @transform_0(%arg0: i32, %arg1: i32) -> (i32, i32, i32, i32) {
    %c0_i32 = arith.constant 0 : i32
    %c0_i32_0 = arith.constant 0 : i32
    %c0_i32_1 = arith.constant 0 : i32
    %c0_i32_2 = arith.constant 0 : i32
    return %arg0, %c0_i32, %c0_i32_0, %c0_i32_1 : i32, i32, i32, i32
  }
  func.func @transform_1(%arg0: i32, %arg1: i32) -> (i32, i32) {
    %c0_i32 = arith.constant 0 : i32
    %c0_i32_0 = arith.constant 0 : i32
    return %c0_i32, %arg1 : i32, i32
  }
  func.func @transform_2(%arg0: i32, %arg1: i32) -> (i32, i32) {
    %c0_i32 = arith.constant 0 : i32
    %c0_i32_0 = arith.constant 0 : i32
    return %c0_i32, %arg1 : i32, i32
  }
  func.func @transform_3(%arg0: i32, %arg1: i32) -> (i32, i32) {
    %c0_i32 = arith.constant 0 : i32
    %c0_i32_0 = arith.constant 0 : i32
    return %c0_i32, %arg1 : i32, i32
  }
  func.func @transform_4(%arg0: i32, %arg1: i32) -> (i32, i32, i32, i32) {
    %c0_i32 = arith.constant 0 : i32
    %c0_i32_0 = arith.constant 0 : i32
    %c0_i32_1 = arith.constant 0 : i32
    return %arg0, %c0_i32, %c0_i32_0, %arg1 : i32, i32, i32, i32
  }
  func.func @transform_5(%arg0: i32, %arg1: i32) -> (i32, i32, i32, i32) {
    %c0_i32 = arith.constant 0 : i32
    %c0_i32_0 = arith.constant 0 : i32
    %c0_i32_1 = arith.constant 0 : i32
    return %arg0, %c0_i32, %c0_i32_0, %arg1 : i32, i32, i32, i32
  }
}

</mosaic_0001>

<llo_original>
// kernel: tpu_custom_call.1
$region0: #{tpu_custom_call.1}
  #allocation0 [shape = 'u32[]', space=smem, size = 0x4, offset = 0x4, fixed_abs, tag = 'smem constant byte address 0x4 - core index']
  #allocation1 [shape = 'u32[144,128]{1,0:T(1,128)}', space=vmem, size = 0x12000, scoped, tag = 'internal scratch']
  #allocation2 [shape = 'bf16[10,10,16]{2,1,0:T(8,128)(2,1)}', space=vmem, size = 0xa000, scoped, tag = 'scratch operand']
  %s0 = inlined_call_operand.hbm [shape: bf16[2,8,8,16], index: 0, kind: input, shape index: {}]
  %s1 = inlined_call_operand.hbm [shape: bf16[144,256], index: 1, kind: input, shape index: {}]
  %s2 = inlined_call_operand.vmem [shape: f32[1,256], index: 2, kind: input, shape index: {}]
  %s3 = inlined_call_operand.vmem [shape: f32[1,256], index: 3, kind: input, shape index: {}]
  %s4 = inlined_call_operand.hbm [shape: bf16[2,8,8,256], index: 4, kind: input, shape index: {}]
  %s5 = inlined_call_operand.hbm [shape: f32[2,8,8,256], index: 5, kind: output, shape index: {}]
  %s6 = sld [smem:[#allocation0]]
  $region65: #{tpu_custom_call.1} parent=0
    _
  %s8 = ssub.s32 1, %s6
  %s9 = scalar_select 0, %s8, %s6
  $region1: #{tpu_custom_call.1} parent=0
    #allocation3 [shape = 'u8[32768]{0}', space=vmem, size = 0x8000, scoped, tag = 'input window, operand 0']
    #allocation4 [shape = 's32[2]{0}', space=sflag, size = 0x8, scoped, tag = 'scoped memory for tpu_custom_call.1']
    #allocation5 [shape = 's32[2]{0}', space=sflag, size = 0x8, scoped, tag = 'scoped memory for tpu_custom_call.1']
    #allocation6 [shape = 'u8[73728]{0}', space=vmem, size = 0x12000, scoped, tag = 'input window, operand 1']
    #allocation7 [shape = 's32[2]{0}', space=sflag, size = 0x8, scoped, tag = 'scoped memory for tpu_custom_call.1']
    #allocation8 [shape = 'u8[32768]{0}', space=vmem, size = 0x8000, scoped, tag = 'input window, operand 4']
    #allocation9 [shape = 'u8[65536]{0}', space=vmem, size = 0x10000, scoped, tag = 'output window, operand 0']
    %10 = vsyncpa [#allocation4], 0
    %s11 = scalar_lea.sflag [#allocation4], 1
    %12 = vsyncpa %s11, 0
    %13 = vsyncpa [#allocation7], 0
    %s14 = scalar_lea.sflag [#allocation7], 1
    %15 = vsyncpa %s14, 0
    %16 = vsyncpa [#allocation5], 0
    %s17 = scalar_lea.sflag [#allocation5], 1
    %18 = vsyncpa %s17, 0
    loop: start=0, step=1, limit=6
    $region2: #{tpu_custom_call.1} parent=1 // loop_pre_header
      _
    $region3: #{tpu_custom_call.1} parent=1 // loop_header
      %s20 = sphi 0, %s24
      %p21 = scmp.ge.s32.totalorder %s20, 6
      %s27 = sphi 0, %s39
      %s28 = sphi 0, %s35
      %s29 = sphi 0, %s27
      %s30 = sphi 0, %s28
      %s31 = sphi 0, %s29
      %s32 = sphi 0, %s30
      %s42 = sphi 0, %s44
      %s45 = sphi 0, %s42
      %s46 = sphi 0, %s45
      %s62 = sphi 0, %s46
      %s68 = sphi 0, %s70
      %s71 = sphi 0, %s68
      %s72 = sphi 0, %s71
      %s88 = sphi 0, %s72
      %s94 = sphi 0, %s96
      %s97 = sphi 0, %s94
      %s98 = sphi 0, %s97
      %s114 = sphi 0, %s98
      %s120 = sphi 0, %s122
      %s123 = sphi 0, %s120
      %s124 = sphi 0, %s123
      %s140 = sphi 0, %s124
      %s148 = sphi 0, %s150
      %s151 = sphi 0, %s148
      %s152 = sphi 0, %s151
      %s168 = sphi 0, %s152
      %s176 = sphi 0, %s178
      %s179 = sphi 0, %s176
      %s180 = sphi 0, %s179
      %s196 = sphi 0, %s180
    $region4: #{tpu_custom_call.1} parent=1 // loop_header_branch
      %23 = sbr.rel (%p21) target = $region8
    $region5: #{tpu_custom_call.1} parent=1 // loop_body
      %s25 = ssub.s32 %s20, 1
      %s26 = ssub.s32 %s20, 2
      %s33 = sadd.s32 1, %s28
      %p34 = scmp.ge.s32.totalorder %s33, 2
      %s35 = scalar_select %p34, 0, %s33
      %s36 = sadd.s32 1, %s27
      %s37 = scalar_select %p34, %s36, %s27
      %p38 = scmp.ge.s32.totalorder %s37, 2
      %s39 = scalar_select %p38, 0, %s37
      %s40 = ssub.s32 %s27, %s39
      %p41 = scmp.eq.s32.totalorder %s40, 0
      %s43 = sadd.s32 %s42, 1
      %s44 = scalar_select %p41, %s42, %s43
      %p47 = pneg %p41
      %p48 = scmp.eq.s32.totalorder %s20, 3
      %p49 = por %p47, %p48
      %p50 = scmp.ne.s32.totalorder %s42, %s45
      %p51 = scmp.eq.s32.totalorder %s20, 0
      %p52 = por %p50, %p51
      %p53 = scmp.ne.s32.totalorder %s42, %s45
      %p54 = scmp.eq.s32.totalorder %s25, 3
      %p55 = por %p53, %p54
      %p56 = scmp.ne.s32.totalorder %s45, %s46
      %p57 = scmp.eq.s32.totalorder %s25, 0
      %p58 = por %p56, %p57
      %p59 = scmp.ne.s32.totalorder %s45, %s46
      %p60 = scmp.eq.s32.totalorder %s26, 3
      %p61 = por %p59, %p60
      %p63 = scmp.ne.s32.totalorder %s46, %s62
      %p64 = scmp.eq.s32.totalorder %s26, 0
      %p65 = por %p63, %p64
      %s66 = ssub.s32 %s28, %s35
      %p67 = scmp.eq.s32.totalorder %s66, 0
      %s69 = sadd.s32 %s68, 1
      %s70 = scalar_select %p67, %s68, %s69
      %p73 = pneg %p67
      %p74 = scmp.eq.s32.totalorder %s20, 3
      %p75 = por %p73, %p74
      %p76 = scmp.ne.s32.totalorder %s68, %s71
      %p77 = scmp.eq.s32.totalorder %s20, 0
      %p78 = por %p76, %p77
      %p79 = scmp.ne.s32.totalorder %s68, %s71
      %p80 = scmp.eq.s32.totalorder %s25, 3
      %p81 = por %p79, %p80
      %p82 = scmp.ne.s32.totalorder %s71, %s72
      %p83 = scmp.eq.s32.totalorder %s25, 0
      %p84 = por %p82, %p83
      %p85 = scmp.ne.s32.totalorder %s71, %s72
      %p86 = scmp.eq.s32.totalorder %s26, 3
      %p87 = por %p85, %p86
      %p89 = scmp.ne.s32.totalorder %s72, %s88
      %p90 = scmp.eq.s32.totalorder %s26, 0
      %p91 = por %p89, %p90
      %s92 = ssub.s32 %s28, %s35
      %p93 = scmp.eq.s32.totalorder %s92, 0
      %s95 = sadd.s32 %s94, 1
      %s96 = scalar_select %p93, %s94, %s95
      %p99 = pneg %p93
      %p100 = scmp.eq.s32.totalorder %s20, 3
      %p101 = por %p99, %p100
      %p102 = scmp.ne.s32.totalorder %s94, %s97
      %p103 = scmp.eq.s32.totalorder %s20, 0
      %p104 = por %p102, %p103
      %p105 = scmp.ne.s32.totalorder %s94, %s97
      %p106 = scmp.eq.s32.totalorder %s25, 3
      %p107 = por %p105, %p106
      %p108 = scmp.ne.s32.totalorder %s97, %s98
      %p109 = scmp.eq.s32.totalorder %s25, 0
      %p110 = por %p108, %p109
      %p111 = scmp.ne.s32.totalorder %s97, %s98
      %p112 = scmp.eq.s32.totalorder %s26, 3
      %p113 = por %p111, %p112
      %p115 = scmp.ne.s32.totalorder %s98, %s114
      %p116 = scmp.eq.s32.totalorder %s26, 0
      %p117 = por %p115, %p116
      %s118 = ssub.s32 %s28, %s35
      %p119 = scmp.eq.s32.totalorder %s118, 0
      %s121 = sadd.s32 %s120, 1
      %s122 = scalar_select %p119, %s120, %s121
      %p125 = pneg %p119
      %p126 = scmp.eq.s32.totalorder %s20, 3
      %p127 = por %p125, %p126
      %p128 = scmp.ne.s32.totalorder %s120, %s123
      %p129 = scmp.eq.s32.totalorder %s20, 0
      %p130 = por %p128, %p129
      %p131 = scmp.ne.s32.totalorder %s120, %s123
      %p132 = scmp.eq.s32.totalorder %s25, 3
      %p133 = por %p131, %p132
      %p134 = scmp.ne.s32.totalorder %s123, %s124
      %p135 = scmp.eq.s32.totalorder %s25, 0
      %p136 = por %p134, %p135
      %p137 = scmp.ne.s32.totalorder %s123, %s124
      %p138 = scmp.eq.s32.totalorder %s26, 3
      %p139 = por %p137, %p138
      %p141 = scmp.ne.s32.totalorder %s124, %s140
      %p142 = scmp.eq.s32.totalorder %s26, 0
      %p143 = por %p141, %p142
      %s144 = ssub.s32 %s27, %s39
      %s145 = ssub.s32 %s28, %s35
      %s146 = sor.u32 %s144, %s145
      %p147 = scmp.eq.s32.totalorder %s146, 0
      %s149 = sadd.s32 %s148, 1
      %s150 = scalar_select %p147, %s148, %s149
      %p153 = pneg %p147
      %p154 = scmp.eq.s32.totalorder %s20, 3
      %p155 = por %p153, %p154
      %p156 = scmp.ne.s32.totalorder %s148, %s151
      %p157 = scmp.eq.s32.totalorder %s20, 0
      %p158 = por %p156, %p157
      %p159 = scmp.ne.s32.totalorder %s148, %s151
      %p160 = scmp.eq.s32.totalorder %s25, 3
      %p161 = por %p159, %p160
      %p162 = scmp.ne.s32.totalorder %s151, %s152
      %p163 = scmp.eq.s32.totalorder %s25, 0
      %p164 = por %p162, %p163
      %p165 = scmp.ne.s32.totalorder %s151, %s152
      %p166 = scmp.eq.s32.totalorder %s26, 3
      %p167 = por %p165, %p166
      %p169 = scmp.ne.s32.totalorder %s152, %s168
      %p170 = scmp.eq.s32.totalorder %s26, 0
      %p171 = por %p169, %p170
      %s172 = ssub.s32 %s27, %s39
      %s173 = ssub.s32 %s28, %s35
      %s174 = sor.u32 %s172, %s173
      %p175 = scmp.eq.s32.totalorder %s174, 0
      %s177 = sadd.s32 %s176, 1
      %s178 = scalar_select %p175, %s176, %s177
      %p181 = pneg %p175
      %p182 = scmp.eq.s32.totalorder %s20, 3
      %p183 = por %p181, %p182
      %p184 = scmp.ne.s32.totalorder %s176, %s179
      %p185 = scmp.eq.s32.totalorder %s20, 0
      %p186 = por %p184, %p185
      %p187 = scmp.ne.s32.totalorder %s176, %s179
      %p188 = scmp.eq.s32.totalorder %s25, 3
      %p189 = por %p187, %p188
      %p190 = scmp.ne.s32.totalorder %s179, %s180
      %p191 = scmp.eq.s32.totalorder %s25, 0
      %p192 = por %p190, %p191
      %p193 = scmp.ne.s32.totalorder %s179, %s180
      %p194 = scmp.eq.s32.totalorder %s26, 3
      %p195 = por %p193, %p194
      %p197 = scmp.ne.s32.totalorder %s180, %s196
      %p198 = scmp.eq.s32.totalorder %s26, 0
      %p199 = por %p197, %p198
      %p200 = scmp.le.s32.totalorder 1, %s20
      %p201 = scmp.lt.s32.totalorder %s20, 5
      %p202 = pnand %p200, %p201
      %p203 = pneg %p202
      // Predicated region
      $region9: #{tpu_custom_call.1} parent=5 // pred_check
        _
      $region10: #{tpu_custom_call.1} parent=5 // pred_check_branch
        %205 = sbr.rel (%p202) target = $region12
      $region11: #{tpu_custom_call.1} parent=5 // pred_region
        %s206 = ssub.s32 %s20, 1
      $region12: #{tpu_custom_call.1} parent=5 // pred_fallthru
        _
      %p207 = scmp.lt.s32.totalorder %s20, 4
      // Predicated region
      $region13: #{tpu_custom_call.1} parent=5 // pred_check
        %p208 = pneg %p207
      $region14: #{tpu_custom_call.1} parent=5 // pred_check_branch
        %210 = sbr.rel (%p208) target = $region16
      $region15: #{tpu_custom_call.1} parent=5 // pred_region
        // Predicated region
        $region17: #{tpu_custom_call.1} parent=15 // pred_check
          %p211 = pneg %p52
        $region18: #{tpu_custom_call.1} parent=15 // pred_check_branch
          %213 = sbr.rel (%p211) target = $region20
        $region19: #{tpu_custom_call.1} parent=15 // pred_region
          %s214 = sand.u32 %s42, 1
          %s215 = scalar_lea.sflag [#allocation4], %s214
          %s216 = sand.u32 %s42, 1
          %s217 = smul.addr %s216, 32
          %s218 = scalar_lea.vmem [#allocation3], %s217
          %s220 = ssub.s32 512, 512
          %221 = vsyncadd %s215, %s220
          %s222 = smul.addr %s27, 8
          %s223 = smul.addr %s222, 64
          %s224 = scalar_lea.hbm %s0, %s223
          %s225 = sshll.u32 %s218, 4
          %s226 = int_to_ptr.vmem [resolvable:$true] %s225
          %231 = dma.hbm_to_vmem [thread:$0]  %s224, 512, %s226, %s215, 64, 64, 4
        $region20: #{tpu_custom_call.1} parent=15 // pred_fallthru
          _
        // Predicated region
        $region21: #{tpu_custom_call.1} parent=15 // pred_check
          %p232 = pneg %p78
        $region22: #{tpu_custom_call.1} parent=15 // pred_check_branch
          %234 = sbr.rel (%p232) target = $region24
        $region23: #{tpu_custom_call.1} parent=15 // pred_region
          %s235 = sand.u32 %s20, 1
          %s236 = scalar_lea.sflag [#allocation7], %s235
          %s237 = sand.u32 %s68, 1
          %s238 = smul.addr %s237, 72
          %s239 = scalar_lea.vmem [#allocation6], %s238
          %s241 = ssub.s32 1152, 1152
          %242 = vsyncadd %s236, %s241
          %s243 = smul.addr %s28, 64
          %s244 = scalar_lea.hbm %s1, %s243
          %s245 = sshll.u32 %s239, 4
          %s246 = int_to_ptr.vmem [resolvable:$true] %s245
          %251 = dma.hbm_to_vmem [thread:$0]  %s244, 1152, %s246, %s236, 128, 64, 4
        $region24: #{tpu_custom_call.1} parent=15 // pred_fallthru
          _
        // Predicated region
        $region25: #{tpu_custom_call.1} parent=15 // pred_check
          %p252 = pneg %p104
        $region26: #{tpu_custom_call.1} parent=15 // pred_check_branch
          %254 = sbr.rel (%p252) target = $region28
        $region27: #{tpu_custom_call.1} parent=15 // pred_region
          %p255 = scmp.lt.s32.totalorder %s28, 1
          %s256 = scalar_select %p255, %s28, 1
          %s257 = scalar_lea.vmem %s2, %s256
        $region28: #{tpu_custom_call.1} parent=15 // pred_fallthru
          _
        // Predicated region
        $region29: #{tpu_custom_call.1} parent=15 // pred_check
          %p258 = pneg %p130
        $region30: #{tpu_custom_call.1} parent=15 // pred_check_branch
          %260 = sbr.rel (%p258) target = $region32
        $region31: #{tpu_custom_call.1} parent=15 // pred_region
          %p261 = scmp.lt.s32.totalorder %s28, 1
          %s262 = scalar_select %p261, %s28, 1
          %s263 = scalar_lea.vmem %s3, %s262
        $region32: #{tpu_custom_call.1} parent=15 // pred_fallthru
          _
        // Predicated region
        $region33: #{tpu_custom_call.1} parent=15 // pred_check
          %p264 = pneg %p158
        $region34: #{tpu_custom_call.1} parent=15 // pred_check_branch
          %266 = sbr.rel (%p264) target = $region36
        $region35: #{tpu_custom_call.1} parent=15 // pred_region
          %s267 = sand.u32 %s20, 1
          %s268 = scalar_lea.sflag [#allocation7], %s267
          %s269 = sand.u32 %s148, 1
          %s270 = smul.addr %s269, 32
          %s271 = scalar_lea.vmem [#allocation8], %s270
          %s273 = ssub.s32 512, 512
          %274 = vsyncadd %s268, %s273
          %s275 = smul.addr %s27, 16
          %s276 = sadd.s32 %s28, %s275
          %s277 = smul.addr %s276, 64
          %s278 = scalar_lea.hbm %s4, %s277
          %s279 = sshll.u32 %s271, 4
          %s280 = int_to_ptr.vmem [resolvable:$true] %s279
          %285 = dma.hbm_to_vmem [thread:$0]  %s278, 512, %s280, %s268, 128, 64, 4
        $region36: #{tpu_custom_call.1} parent=15 // pred_fallthru
          _
      $region16: #{tpu_custom_call.1} parent=5 // pred_fallthru
        _
      %p286 = scmp.le.s32.totalorder 1, %s20
      %p287 = scmp.lt.s32.totalorder %s20, 5
      %p288 = pnand %p286, %p287
      %p289 = pneg %p288
      // Predicated region
      $region37: #{tpu_custom_call.1} parent=5 // pred_check
        _
      $region38: #{tpu_custom_call.1} parent=5 // pred_check_branch
        %291 = sbr.rel (%p288) target = $region40
      $region39: #{tpu_custom_call.1} parent=5 // pred_region
        %s292 = ssub.s32 %s20, 1
        %s293 = sand.u32 %s45, 1
        %s294 = scalar_lea.sflag [#allocation4], %s293
        %s295 = sand.u32 %s45, 1
        %s296 = smul.addr %s295, 32
        %s297 = scalar_lea.vmem [#allocation3], %s296
        // Predicated region
        $region41: #{tpu_custom_call.1} parent=39 // pred_check
          %p298 = pneg %p58
        $region42: #{tpu_custom_call.1} parent=39 // pred_check_branch
          %300 = sbr.rel (%p298) target = $region44
        $region43: #{tpu_custom_call.1} parent=39 // pred_region
          %301 = dma.done %s294, 512
        $region44: #{tpu_custom_call.1} parent=39 // pred_fallthru
          _
        %s302 = sand.u32 %s25, 1
        %s303 = scalar_lea.sflag [#allocation7], %s302
        %s304 = sand.u32 %s71, 1
        %s305 = smul.addr %s304, 72
        %s306 = scalar_lea.vmem [#allocation6], %s305
        // Predicated region
        $region45: #{tpu_custom_call.1} parent=39 // pred_check
          %p307 = pneg %p84
        $region46: #{tpu_custom_call.1} parent=39 // pred_check_branch
          %309 = sbr.rel (%p307) target = $region48
        $region47: #{tpu_custom_call.1} parent=39 // pred_region
          %310 = dma.done %s303, 1152
        $region48: #{tpu_custom_call.1} parent=39 // pred_fallthru
          _
        %s311 = sand.u32 %s25, 1
        %s312 = scalar_lea.sflag [#allocation7], %s311
        %s313 = sand.u32 %s151, 1
        %s314 = smul.addr %s313, 32
        %s315 = scalar_lea.vmem [#allocation8], %s314
        // Predicated region
        $region49: #{tpu_custom_call.1} parent=39 // pred_check
          %p316 = pneg %p164
        $region50: #{tpu_custom_call.1} parent=39 // pred_check_branch
          %318 = sbr.rel (%p316) target = $region52
        $region51: #{tpu_custom_call.1} parent=39 // pred_region
          %319 = dma.done %s312, 512
        $region52: #{tpu_custom_call.1} parent=39 // pred_fallthru
          _
        %s320 = sand.u32 %s45, 1
        %s321 = scalar_lea.sflag [#allocation4], %s320
        %s322 = sand.u32 %s45, 1
        %s323 = smul.addr %s322, 32
        %s324 = scalar_lea.vmem [#allocation3], %s323
        %p325 = pneg %p58
        %p326 = pneg %p55
        %s327 = sand.u32 %s25, 1
        %s328 = scalar_lea.sflag [#allocation7], %s327
        %s329 = sand.u32 %s71, 1
        %s330 = smul.addr %s329, 72
        %s331 = scalar_lea.vmem [#allocation6], %s330
        %p332 = pneg %p84
        %p333 = pneg %p81
        %p334 = scmp.lt.s32.totalorder %s30, 1
        %s335 = scalar_select %p334, %s30, 1
        %s336 = scalar_lea.vmem %s2, %s335
        %p337 = pneg %p110
        %p338 = pneg %p107
        %p339 = scmp.lt.s32.totalorder %s30, 1
        %s340 = scalar_select %p339, %s30, 1
        %s341 = scalar_lea.vmem %s3, %s340
        %p342 = pneg %p136
        %p343 = pneg %p133
        %s344 = sand.u32 %s25, 1
        %s345 = scalar_lea.sflag [#allocation7], %s344
        %s346 = sand.u32 %s151, 1
        %s347 = smul.addr %s346, 32
        %s348 = scalar_lea.vmem [#allocation8], %s347
        %p349 = pneg %p164
        %p350 = pneg %p161
        %p351 = pneg %p192
        %p352 = pneg %p189
        %s353 = sand.u32 %s179, 1
        %s354 = scalar_lea.sflag [#allocation5], %s353
        %s355 = sand.u32 %s179, 1
        %s356 = smul.addr %s355, 64
        %s357 = scalar_lea.vmem [#allocation9], %s356
        %p358 = scmp.lt.s32.totalorder %s30, 1
        %s359 = scalar_select %p358, %s30, 1
        %s360 = scalar_lea.vmem %s2, %s359
        %p361 = scmp.lt.s32.totalorder %s30, 1
        %s362 = scalar_select %p361, %s30, 1
        %s363 = scalar_lea.vmem %s3, %s362
        %vm365 = vcmask 125952
        %366 = vst.msk [vmem:[#allocation2] sm:$0xf] %vm365, 0
        %vm367 = vcmask 122880
        %368 = vst.msk [vmem:[#allocation2 + $0x4] sm:$0x1] %vm367, 0
        %369 = vst.msk [vmem:[#allocation2 + $0x8] sm:$0xf] %vm365, 0
        %370 = vst.msk [vmem:[#allocation2 + $0xc] sm:$0x1] %vm367, 0
        %371 = vst.msk [vmem:[#allocation2 + $0x10] sm:$0xf] %vm365, 0
        %372 = vst.msk [vmem:[#allocation2 + $0x14] sm:$0x1] %vm367, 0
        %373 = vst.msk [vmem:[#allocation2 + $0x18] sm:$0xf] %vm365, 0
        %374 = vst.msk [vmem:[#allocation2 + $0x1c] sm:$0x1] %vm367, 0
        %375 = vst.msk [vmem:[#allocation2 + $0x20] sm:$0xf] %vm365, 0
        %376 = vst.msk [vmem:[#allocation2 + $0x24] sm:$0x1] %vm367, 0
        %377 = vst.msk [vmem:[#allocation2 + $0x28] sm:$0xf] %vm365, 0
        %378 = vst.msk [vmem:[#allocation2 + $0x2c] sm:$0x1] %vm367, 0
        %379 = vst.msk [vmem:[#allocation2 + $0x30] sm:$0xf] %vm365, 0
        %380 = vst.msk [vmem:[#allocation2 + $0x34] sm:$0x1] %vm367, 0
        %381 = vst.msk [vmem:[#allocation2 + $0x38] sm:$0xf] %vm365, 0
        %382 = vst.msk [vmem:[#allocation2 + $0x3c] sm:$0x1] %vm367, 0
        %383 = vst.msk [vmem:[#allocation2 + $0x40] sm:$0xf] %vm365, 0
        %384 = vst.msk [vmem:[#allocation2 + $0x44] sm:$0x1] %vm367, 0
        %385 = vst.msk [vmem:[#allocation2 + $0x48] sm:$0xf] %vm365, 0
        %386 = vst.msk [vmem:[#allocation2 + $0x4c] sm:$0x1] %vm367, 0
        %v387 = vld [vmem:[%s297] sm:$0xf]
        %v388 = vld [vmem:[%s297 + $0x4] sm:$0xf]
        %v389 = vld [vmem:[%s297 + $0x8] sm:$0xf]
        %v390 = vld [vmem:[%s297 + $0xc] sm:$0xf]
        %v391 = vld [vmem:[%s297 + $0x10] sm:$0xf]
        %v392 = vld [vmem:[%s297 + $0x14] sm:$0xf]
        %v393 = vld [vmem:[%s297 + $0x18] sm:$0xf]
        %v394 = vld [vmem:[%s297 + $0x1c] sm:$0xf]
        %v396 = vshrl.u32 %v387, 16
        %v398 = vrot.slane %v396, 7
        %v399 = vshll.u32 %v387, 16
        %v401 = vor.u32 %v398, %v399
        %v402 = vrot.slane %v398, 4
        %v404 = vshrl.u32 %v388, 16
        %v406 = vrot.slane %v404, 7
        %v407 = vshll.u32 %v388, 16
        %v409 = vor.u32 %v406, %v407
        %v410 = vrot.slane %v406, 4
        %v412 = vshrl.u32 %v389, 16
        %v414 = vrot.slane %v412, 7
        %v415 = vshll.u32 %v389, 16
        %v417 = vor.u32 %v414, %v415
        %v418 = vrot.slane %v414, 4
        %v420 = vshrl.u32 %v390, 16
        %v422 = vrot.slane %v420, 7
        %v423 = vshll.u32 %v390, 16
        %v425 = vor.u32 %v422, %v423
        %v426 = vrot.slane %v422, 4
        %v428 = vshrl.u32 %v391, 16
        %v430 = vrot.slane %v428, 7
        %v431 = vshll.u32 %v391, 16
        %v433 = vor.u32 %v430, %v431
        %v434 = vrot.slane %v430, 4
        %v436 = vshrl.u32 %v392, 16
        %v438 = vrot.slane %v436, 7
        %v439 = vshll.u32 %v392, 16
        %v441 = vor.u32 %v438, %v439
        %v442 = vrot.slane %v438, 4
        %v444 = vshrl.u32 %v393, 16
        %v446 = vrot.slane %v444, 7
        %v447 = vshll.u32 %v393, 16
        %v449 = vor.u32 %v446, %v447
        %v450 = vrot.slane %v446, 4
        %v452 = vshrl.u32 %v394, 16
        %v454 = vrot.slane %v452, 7
        %v455 = vshll.u32 %v394, 16
        %v457 = vor.u32 %v454, %v455
        %v458 = vrot.slane %v454, 4
        %s475 = scalar_lea.vmem [#allocation2], 8
        %vm476 = vcmask 125952
        %vm477 = vsmask.f32 7938
        %vm478 = vmand %vm476, %vm477
        %v479 = vld [vmem:[%s475] sm:$0xf]
        %v480 = vsel %vm478, %v401, %v479
        %481 = vst [vmem:[%s475] sm:$0xf] %v480
        %vm482 = vcmask 122880
        %vm483 = vsmask.f32 256
        %vm484 = vmand %vm482, %vm483
        %v485 = vld [vmem:[%s475 + $0x4] sm:$0x1]
        %v486 = vsel %vm484, %v402, %v485
        %487 = vst [vmem:[%s475 + $0x4] sm:$0x1] %v486
        %v488 = vld [vmem:[%s475 + $0x8] sm:$0xf]
        %v489 = vsel %vm478, %v409, %v488
        %490 = vst [vmem:[%s475 + $0x8] sm:$0xf] %v489
        %v491 = vld [vmem:[%s475 + $0xc] sm:$0x1]
        %v492 = vsel %vm484, %v410, %v491
        %493 = vst [vmem:[%s475 + $0xc] sm:$0x1] %v492
        %v494 = vld [vmem:[%s475 + $0x10] sm:$0xf]
        %v495 = vsel %vm478, %v417, %v494
        %496 = vst [vmem:[%s475 + $0x10] sm:$0xf] %v495
        %v497 = vld [vmem:[%s475 + $0x14] sm:$0x1]
        %v498 = vsel %vm484, %v418, %v497
        %499 = vst [vmem:[%s475 + $0x14] sm:$0x1] %v498
        %v500 = vld [vmem:[%s475 + $0x18] sm:$0xf]
        %v501 = vsel %vm478, %v425, %v500
        %502 = vst [vmem:[%s475 + $0x18] sm:$0xf] %v501
        %v503 = vld [vmem:[%s475 + $0x1c] sm:$0x1]
        %v504 = vsel %vm484, %v426, %v503
        %505 = vst [vmem:[%s475 + $0x1c] sm:$0x1] %v504
        %v506 = vld [vmem:[%s475 + $0x20] sm:$0xf]
        %v507 = vsel %vm478, %v433, %v506
        %508 = vst [vmem:[%s475 + $0x20] sm:$0xf] %v507
        %v509 = vld [vmem:[%s475 + $0x24] sm:$0x1]
        %v510 = vsel %vm484, %v434, %v509
        %511 = vst [vmem:[%s475 + $0x24] sm:$0x1] %v510
        %v512 = vld [vmem:[%s475 + $0x28] sm:$0xf]
        %v513 = vsel %vm478, %v441, %v512
        %514 = vst [vmem:[%s475 + $0x28] sm:$0xf] %v513
        %v515 = vld [vmem:[%s475 + $0x2c] sm:$0x1]
        %v516 = vsel %vm484, %v442, %v515
        %517 = vst [vmem:[%s475 + $0x2c] sm:$0x1] %v516
        %v518 = vld [vmem:[%s475 + $0x30] sm:$0xf]
        %v519 = vsel %vm478, %v449, %v518
        %520 = vst [vmem:[%s475 + $0x30] sm:$0xf] %v519
        %v521 = vld [vmem:[%s475 + $0x34] sm:$0x1]
        %v522 = vsel %vm484, %v450, %v521
        %523 = vst [vmem:[%s475 + $0x34] sm:$0x1] %v522
        %v524 = vld [vmem:[%s475 + $0x38] sm:$0xf]
        %v525 = vsel %vm478, %v457, %v524
        %526 = vst [vmem:[%s475 + $0x38] sm:$0xf] %v525
        %v527 = vld [vmem:[%s475 + $0x3c] sm:$0x1]
        %v528 = vsel %vm484, %v458, %v527
        %529 = vst [vmem:[%s475 + $0x3c] sm:$0x1] %v528
        %v530 = vld [vmem:[#allocation2] sm:$0xf]
        %v531 = vld [vmem:[#allocation2 + $0x8] sm:$0xf]
        %v532 = vld [vmem:[#allocation2 + $0x10] sm:$0xf]
        %v533 = vld [vmem:[#allocation2 + $0x18] sm:$0xf]
        %v534 = vld [vmem:[#allocation2 + $0x20] sm:$0xf]
        %v535 = vld [vmem:[#allocation2 + $0x28] sm:$0xf]
        %v536 = vld [vmem:[#allocation2 + $0x30] sm:$0xf]
        %v537 = vld [vmem:[#allocation2 + $0x38] sm:$0xf]
        %v538 = vld [vmem:[#allocation2 + $0x4] sm:$0x1]
        %v539 = vld [vmem:[#allocation2 + $0xc] sm:$0x1]
        %v540 = vld [vmem:[#allocation2 + $0x14] sm:$0x1]
        %v541 = vld [vmem:[#allocation2 + $0x1c] sm:$0x1]
        %v542 = vld [vmem:[#allocation2 + $0x24] sm:$0x1]
        %v543 = vld [vmem:[#allocation2 + $0x2c] sm:$0x1]
        %v544 = vld [vmem:[#allocation2 + $0x34] sm:$0x1]
        %v545 = vld [vmem:[#allocation2 + $0x3c] sm:$0x1]
        %vm546 = vsmask.f32 3328
        %vm547 = vsmask.f32 7440
        %vm548 = vmor %vm546, %vm547
        %v550 = vshrl.u32 %v530, 16
        %v552 = vrot.slane %v550, 4
        %v553 = vshll.u32 %v530, 16
        %v555 = vrot.slane %v553, 5
        %v556 = vor.u32 %v552, %v555
        %v557 = vrot.slane %v556, 4
        %v559 = vshll.u32 %v538, 16
        %v561 = vrot.slane %v559, 5
        %v562 = vsel %vm548, %v557, %v561
        %v564 = vshrl.u32 %v531, 16
        %v566 = vrot.slane %v564, 4
        %v567 = vshll.u32 %v531, 16
        %v569 = vrot.slane %v567, 5
        %v570 = vor.u32 %v566, %v569
        %v571 = vrot.slane %v570, 4
        %v573 = vshll.u32 %v539, 16
        %v575 = vrot.slane %v573, 5
        %v576 = vsel %vm548, %v571, %v575
        %v578 = vshrl.u32 %v532, 16
        %v580 = vrot.slane %v578, 4
        %v581 = vshll.u32 %v532, 16
        %v583 = vrot.slane %v581, 5
        %v584 = vor.u32 %v580, %v583
        %v585 = vrot.slane %v584, 4
        %v587 = vshll.u32 %v540, 16
        %v589 = vrot.slane %v587, 5
        %v590 = vsel %vm548, %v585, %v589
        %v592 = vshrl.u32 %v533, 16
        %v594 = vrot.slane %v592, 4
        %v595 = vshll.u32 %v533, 16
        %v597 = vrot.slane %v595, 5
        %v598 = vor.u32 %v594, %v597
        %v599 = vrot.slane %v598, 4
        %v601 = vshll.u32 %v541, 16
        %v603 = vrot.slane %v601, 5
        %v604 = vsel %vm548, %v599, %v603
        %v606 = vshrl.u32 %v534, 16
        %v608 = vrot.slane %v606, 4
        %v609 = vshll.u32 %v534, 16
        %v611 = vrot.slane %v609, 5
        %v612 = vor.u32 %v608, %v611
        %v613 = vrot.slane %v612, 4
        %v615 = vshll.u32 %v542, 16
        %v617 = vrot.slane %v615, 5
        %v618 = vsel %vm548, %v613, %v617
        %v620 = vshrl.u32 %v535, 16
        %v622 = vrot.slane %v620, 4
        %v623 = vshll.u32 %v535, 16
        %v625 = vrot.slane %v623, 5
        %v626 = vor.u32 %v622, %v625
        %v627 = vrot.slane %v626, 4
        %v629 = vshll.u32 %v543, 16
        %v631 = vrot.slane %v629, 5
        %v632 = vsel %vm548, %v627, %v631
        %v634 = vshrl.u32 %v536, 16
        %v636 = vrot.slane %v634, 4
        %v637 = vshll.u32 %v536, 16
        %v639 = vrot.slane %v637, 5
        %v640 = vor.u32 %v636, %v639
        %v641 = vrot.slane %v640, 4
        %v643 = vshll.u32 %v544, 16
        %v645 = vrot.slane %v643, 5
        %v646 = vsel %vm548, %v641, %v645
        %v648 = vshrl.u32 %v537, 16
        %v650 = vrot.slane %v648, 4
        %v651 = vshll.u32 %v537, 16
        %v653 = vrot.slane %v651, 5
        %v654 = vor.u32 %v650, %v653
        %v655 = vrot.slane %v654, 4
        %v657 = vshll.u32 %v545, 16
        %v659 = vrot.slane %v657, 5
        %v660 = vsel %vm548, %v655, %v659
        %v661 = vld [vmem:[#allocation2] sm:$0xe]
        %v662 = vld [vmem:[#allocation2 + $0x8] sm:$0xe]
        %v663 = vld [vmem:[#allocation2 + $0x10] sm:$0xe]
        %v664 = vld [vmem:[#allocation2 + $0x18] sm:$0xe]
        %v665 = vld [vmem:[#allocation2 + $0x20] sm:$0xe]
        %v666 = vld [vmem:[#allocation2 + $0x28] sm:$0xe]
        %v667 = vld [vmem:[#allocation2 + $0x30] sm:$0xe]
        %v668 = vld [vmem:[#allocation2 + $0x38] sm:$0xe]
        %vm685 = vcmask 1042432
        %vm686 = vcmask 1046532
        %vm687 = vmor %vm685, %vm686
        %v688 = vrot.slane %v661, 5
        %v689 = vrot.slane %v688, 4
        %v690 = vrot.slane %v538, 5
        %v691 = vsel %vm687, %v689, %v690
        %v692 = vrot.slane %v662, 5
        %v693 = vrot.slane %v692, 4
        %v694 = vrot.slane %v539, 5
        %v695 = vsel %vm687, %v693, %v694
        %v696 = vrot.slane %v663, 5
        %v697 = vrot.slane %v696, 4
        %v698 = vrot.slane %v540, 5
        %v699 = vsel %vm687, %v697, %v698
        %v700 = vrot.slane %v664, 5
        %v701 = vrot.slane %v700, 4
        %v702 = vrot.slane %v541, 5
        %v703 = vsel %vm687, %v701, %v702
        %v704 = vrot.slane %v665, 5
        %v705 = vrot.slane %v704, 4
        %v706 = vrot.slane %v542, 5
        %v707 = vsel %vm687, %v705, %v706
        %v708 = vrot.slane %v666, 5
        %v709 = vrot.slane %v708, 4
        %v710 = vrot.slane %v543, 5
        %v711 = vsel %vm687, %v709, %v710
        %v712 = vrot.slane %v667, 5
        %v713 = vrot.slane %v712, 4
        %v714 = vrot.slane %v544, 5
        %v715 = vsel %vm687, %v713, %v714
        %v716 = vrot.slane %v668, 5
        %v717 = vrot.slane %v716, 4
        %v718 = vrot.slane %v545, 5
        %v719 = vsel %vm687, %v717, %v718
        %v720 = vld [vmem:[%s475] sm:$0xf]
        %v721 = vld [vmem:[%s475 + $0x8] sm:$0xf]
        %v722 = vld [vmem:[%s475 + $0x10] sm:$0xf]
        %v723 = vld [vmem:[%s475 + $0x18] sm:$0xf]
        %v724 = vld [vmem:[%s475 + $0x20] sm:$0xf]
        %v725 = vld [vmem:[%s475 + $0x28] sm:$0xf]
        %v726 = vld [vmem:[%s475 + $0x30] sm:$0xf]
        %v727 = vld [vmem:[%s475 + $0x38] sm:$0xf]
        %v728 = vld [vmem:[%s475 + $0x4] sm:$0x1]
        %v729 = vld [vmem:[%s475 + $0xc] sm:$0x1]
        %v730 = vld [vmem:[%s475 + $0x14] sm:$0x1]
        %v731 = vld [vmem:[%s475 + $0x1c] sm:$0x1]
        %v732 = vld [vmem:[%s475 + $0x24] sm:$0x1]
        %v733 = vld [vmem:[%s475 + $0x2c] sm:$0x1]
        %v734 = vld [vmem:[%s475 + $0x34] sm:$0x1]
        %v735 = vld [vmem:[%s475 + $0x3c] sm:$0x1]
        %v737 = vshrl.u32 %v720, 16
        %v739 = vrot.slane %v737, 4
        %v740 = vshll.u32 %v720, 16
        %v742 = vrot.slane %v740, 5
        %v743 = vor.u32 %v739, %v742
        %v744 = vrot.slane %v743, 4
        %v746 = vshll.u32 %v728, 16
        %v748 = vrot.slane %v746, 5
        %v749 = vsel %vm548, %v744, %v748
        %v751 = vshrl.u32 %v721, 16
        %v753 = vrot.slane %v751, 4
        %v754 = vshll.u32 %v721, 16
        %v756 = vrot.slane %v754, 5
        %v757 = vor.u32 %v753, %v756
        %v758 = vrot.slane %v757, 4
        %v760 = vshll.u32 %v729, 16
        %v762 = vrot.slane %v760, 5
        %v763 = vsel %vm548, %v758, %v762
        %v765 = vshrl.u32 %v722, 16
        %v767 = vrot.slane %v765, 4
        %v768 = vshll.u32 %v722, 16
        %v770 = vrot.slane %v768, 5
        %v771 = vor.u32 %v767, %v770
        %v772 = vrot.slane %v771, 4
        %v774 = vshll.u32 %v730, 16
        %v776 = vrot.slane %v774, 5
        %v777 = vsel %vm548, %v772, %v776
        %v779 = vshrl.u32 %v723, 16
        %v781 = vrot.slane %v779, 4
        %v782 = vshll.u32 %v723, 16
        %v784 = vrot.slane %v782, 5
        %v785 = vor.u32 %v781, %v784
        %v786 = vrot.slane %v785, 4
        %v788 = vshll.u32 %v731, 16
        %v790 = vrot.slane %v788, 5
        %v791 = vsel %vm548, %v786, %v790
        %v793 = vshrl.u32 %v724, 16
        %v795 = vrot.slane %v793, 4
        %v796 = vshll.u32 %v724, 16
        %v798 = vrot.slane %v796, 5
        %v799 = vor.u32 %v795, %v798
        %v800 = vrot.slane %v799, 4
        %v802 = vshll.u32 %v732, 16
        %v804 = vrot.slane %v802, 5
        %v805 = vsel %vm548, %v800, %v804
        %v807 = vshrl.u32 %v725, 16
        %v809 = vrot.slane %v807, 4
        %v810 = vshll.u32 %v725, 16
        %v812 = vrot.slane %v810, 5
        %v813 = vor.u32 %v809, %v812
        %v814 = vrot.slane %v813, 4
        %v816 = vshll.u32 %v733, 16
        %v818 = vrot.slane %v816, 5
        %v819 = vsel %vm548, %v814, %v818
        %v821 = vshrl.u32 %v726, 16
        %v823 = vrot.slane %v821, 4
        %v824 = vshll.u32 %v726, 16
        %v826 = vrot.slane %v824, 5
        %v827 = vor.u32 %v823, %v826
        %v828 = vrot.slane %v827, 4
        %v830 = vshll.u32 %v734, 16
        %v832 = vrot.slane %v830, 5
        %v833 = vsel %vm548, %v828, %v832
        %v835 = vshrl.u32 %v727, 16
        %v837 = vrot.slane %v835, 4
        %v838 = vshll.u32 %v727, 16
        %v840 = vrot.slane %v838, 5
        %v841 = vor.u32 %v837, %v840
        %v842 = vrot.slane %v841, 4
        %v844 = vshll.u32 %v735, 16
        %v846 = vrot.slane %v844, 5
        %v847 = vsel %vm548, %v842, %v846
        %v848 = vld [vmem:[%s475] sm:$0xe]
        %v849 = vld [vmem:[%s475 + $0x8] sm:$0xe]
        %v850 = vld [vmem:[%s475 + $0x10] sm:$0xe]
        %v851 = vld [vmem:[%s475 + $0x18] sm:$0xe]
        %v852 = vld [vmem:[%s475 + $0x20] sm:$0xe]
        %v853 = vld [vmem:[%s475 + $0x28] sm:$0xe]
        %v854 = vld [vmem:[%s475 + $0x30] sm:$0xe]
        %v855 = vld [vmem:[%s475 + $0x38] sm:$0xe]
        %v872 = vrot.slane %v848, 5
        %v873 = vrot.slane %v872, 4
        %v874 = vrot.slane %v728, 5
        %v875 = vsel %vm687, %v873, %v874
        %v876 = vrot.slane %v849, 5
        %v877 = vrot.slane %v876, 4
        %v878 = vrot.slane %v729, 5
        %v879 = vsel %vm687, %v877, %v878
        %v880 = vrot.slane %v850, 5
        %v881 = vrot.slane %v880, 4
        %v882 = vrot.slane %v730, 5
        %v883 = vsel %vm687, %v881, %v882
        %v884 = vrot.slane %v851, 5
        %v885 = vrot.slane %v884, 4
        %v886 = vrot.slane %v731, 5
        %v887 = vsel %vm687, %v885, %v886
        %v888 = vrot.slane %v852, 5
        %v889 = vrot.slane %v888, 4
        %v890 = vrot.slane %v732, 5
        %v891 = vsel %vm687, %v889, %v890
        %v892 = vrot.slane %v853, 5
        %v893 = vrot.slane %v892, 4
        %v894 = vrot.slane %v733, 5
        %v895 = vsel %vm687, %v893, %v894
        %v896 = vrot.slane %v854, 5
        %v897 = vrot.slane %v896, 4
        %v898 = vrot.slane %v734, 5
        %v899 = vsel %vm687, %v897, %v898
        %v900 = vrot.slane %v855, 5
        %v901 = vrot.slane %v900, 4
        %v902 = vrot.slane %v735, 5
        %v903 = vsel %vm687, %v901, %v902
        %s904 = scalar_lea.vmem [#allocation2], 16
        %v905 = vld [vmem:[%s904] sm:$0xf]
        %v906 = vld [vmem:[%s904 + $0x8] sm:$0xf]
        %v907 = vld [vmem:[%s904 + $0x10] sm:$0xf]
        %v908 = vld [vmem:[%s904 + $0x18] sm:$0xf]
        %v909 = vld [vmem:[%s904 + $0x20] sm:$0xf]
        %v910 = vld [vmem:[%s904 + $0x28] sm:$0xf]
        %v911 = vld [vmem:[%s904 + $0x30] sm:$0xf]
        %v912 = vld [vmem:[%s904 + $0x38] sm:$0xf]
        %v913 = vld [vmem:[%s904 + $0x4] sm:$0x1]
        %v914 = vld [vmem:[%s904 + $0xc] sm:$0x1]
        %v915 = vld [vmem:[%s904 + $0x14] sm:$0x1]
        %v916 = vld [vmem:[%s904 + $0x1c] sm:$0x1]
        %v917 = vld [vmem:[%s904 + $0x24] sm:$0x1]
        %v918 = vld [vmem:[%s904 + $0x2c] sm:$0x1]
        %v919 = vld [vmem:[%s904 + $0x34] sm:$0x1]
        %v920 = vld [vmem:[%s904 + $0x3c] sm:$0x1]
        %v922 = vshrl.u32 %v905, 16
        %v924 = vrot.slane %v922, 4
        %v925 = vshll.u32 %v905, 16
        %v927 = vrot.slane %v925, 5
        %v928 = vor.u32 %v924, %v927
        %v929 = vrot.slane %v928, 4
        %v931 = vshll.u32 %v913, 16
        %v933 = vrot.slane %v931, 5
        %v934 = vsel %vm548, %v929, %v933
        %v936 = vshrl.u32 %v906, 16
        %v938 = vrot.slane %v936, 4
        %v939 = vshll.u32 %v906, 16
        %v941 = vrot.slane %v939, 5
        %v942 = vor.u32 %v938, %v941
        %v943 = vrot.slane %v942, 4
        %v945 = vshll.u32 %v914, 16
        %v947 = vrot.slane %v945, 5
        %v948 = vsel %vm548, %v943, %v947
        %v950 = vshrl.u32 %v907, 16
        %v952 = vrot.slane %v950, 4
        %v953 = vshll.u32 %v907, 16
        %v955 = vrot.slane %v953, 5
        %v956 = vor.u32 %v952, %v955
        %v957 = vrot.slane %v956, 4
        %v959 = vshll.u32 %v915, 16
        %v961 = vrot.slane %v959, 5
        %v962 = vsel %vm548, %v957, %v961
        %v964 = vshrl.u32 %v908, 16
        %v966 = vrot.slane %v964, 4
        %v967 = vshll.u32 %v908, 16
        %v969 = vrot.slane %v967, 5
        %v970 = vor.u32 %v966, %v969
        %v971 = vrot.slane %v970, 4
        %v973 = vshll.u32 %v916, 16
        %v975 = vrot.slane %v973, 5
        %v976 = vsel %vm548, %v971, %v975
        %v978 = vshrl.u32 %v909, 16
        %v980 = vrot.slane %v978, 4
        %v981 = vshll.u32 %v909, 16
        %v983 = vrot.slane %v981, 5
        %v984 = vor.u32 %v980, %v983
        %v985 = vrot.slane %v984, 4
        %v987 = vshll.u32 %v917, 16
        %v989 = vrot.slane %v987, 5
        %v990 = vsel %vm548, %v985, %v989
        %v992 = vshrl.u32 %v910, 16
        %v994 = vrot.slane %v992, 4
        %v995 = vshll.u32 %v910, 16
        %v997 = vrot.slane %v995, 5
        %v998 = vor.u32 %v994, %v997
        %v999 = vrot.slane %v998, 4
        %v1001 = vshll.u32 %v918, 16
        %v1003 = vrot.slane %v1001, 5
        %v1004 = vsel %vm548, %v999, %v1003
        %v1006 = vshrl.u32 %v911, 16
        %v1008 = vrot.slane %v1006, 4
        %v1009 = vshll.u32 %v911, 16
        %v1011 = vrot.slane %v1009, 5
        %v1012 = vor.u32 %v1008, %v1011
        %v1013 = vrot.slane %v1012, 4
        %v1015 = vshll.u32 %v919, 16
        %v1017 = vrot.slane %v1015, 5
        %v1018 = vsel %vm548, %v1013, %v1017
        %v1020 = vshrl.u32 %v912, 16
        %v1022 = vrot.slane %v1020, 4
        %v1023 = vshll.u32 %v912, 16
        %v1025 = vrot.slane %v1023, 5
        %v1026 = vor.u32 %v1022, %v1025
        %v1027 = vrot.slane %v1026, 4
        %v1029 = vshll.u32 %v920, 16
        %v1031 = vrot.slane %v1029, 5
        %v1032 = vsel %vm548, %v1027, %v1031
        %v1033 = vld [vmem:[%s904] sm:$0xe]
        %v1034 = vld [vmem:[%s904 + $0x8] sm:$0xe]
        %v1035 = vld [vmem:[%s904 + $0x10] sm:$0xe]
        %v1036 = vld [vmem:[%s904 + $0x18] sm:$0xe]
        %v1037 = vld [vmem:[%s904 + $0x20] sm:$0xe]
        %v1038 = vld [vmem:[%s904 + $0x28] sm:$0xe]
        %v1039 = vld [vmem:[%s904 + $0x30] sm:$0xe]
        %v1040 = vld [vmem:[%s904 + $0x38] sm:$0xe]
        %v1057 = vrot.slane %v1033, 5
        %v1058 = vrot.slane %v1057, 4
        %v1059 = vrot.slane %v913, 5
        %v1060 = vsel %vm687, %v1058, %v1059
        %v1061 = vrot.slane %v1034, 5
        %v1062 = vrot.slane %v1061, 4
        %v1063 = vrot.slane %v914, 5
        %v1064 = vsel %vm687, %v1062, %v1063
        %v1065 = vrot.slane %v1035, 5
        %v1066 = vrot.slane %v1065, 4
        %v1067 = vrot.slane %v915, 5
        %v1068 = vsel %vm687, %v1066, %v1067
        %v1069 = vrot.slane %v1036, 5
        %v1070 = vrot.slane %v1069, 4
        %v1071 = vrot.slane %v916, 5
        %v1072 = vsel %vm687, %v1070, %v1071
        %v1073 = vrot.slane %v1037, 5
        %v1074 = vrot.slane %v1073, 4
        %v1075 = vrot.slane %v917, 5
        %v1076 = vsel %vm687, %v1074, %v1075
        %v1077 = vrot.slane %v1038, 5
        %v1078 = vrot.slane %v1077, 4
        %v1079 = vrot.slane %v918, 5
        %v1080 = vsel %vm687, %v1078, %v1079
        %v1081 = vrot.slane %v1039, 5
        %v1082 = vrot.slane %v1081, 4
        %v1083 = vrot.slane %v919, 5
        %v1084 = vsel %vm687, %v1082, %v1083
        %v1085 = vrot.slane %v1040, 5
        %v1086 = vrot.slane %v1085, 4
        %v1087 = vrot.slane %v920, 5
        %v1088 = vsel %vm687, %v1086, %v1087
        %v1097 = vunpack.c.l.b16 %v530
        %v1098 = vunpack.c.l.b16 %v531
        %v1099 = vunpack.c.l.b16 %v532
        %v1100 = vunpack.c.l.b16 %v533
        %v1101 = vunpack.c.l.b16 %v534
        %v1102 = vunpack.c.l.b16 %v535
        %v1103 = vunpack.c.l.b16 %v536
        %v1104 = vunpack.c.l.b16 %v537
        %v1105 = vpack.c.b16 %v1098, %v1097
        %v1106 = vpack.c.b16 %v1100, %v1099
        %v1107 = vpack.c.b16 %v1102, %v1101
        %v1108 = vpack.c.b16 %v1104, %v1103
        %v1109 = vunpack.c.l.b16 %v562
        %v1110 = vunpack.c.l.b16 %v576
        %v1111 = vunpack.c.l.b16 %v590
        %v1112 = vunpack.c.l.b16 %v604
        %v1113 = vunpack.c.l.b16 %v618
        %v1114 = vunpack.c.l.b16 %v632
        %v1115 = vunpack.c.l.b16 %v646
        %v1116 = vunpack.c.l.b16 %v660
        %v1117 = vpack.c.b16 %v1110, %v1109
        %v1118 = vpack.c.b16 %v1112, %v1111
        %v1119 = vpack.c.b16 %v1114, %v1113
        %v1120 = vpack.c.b16 %v1116, %v1115
        %1121 = vrot.lane.b32.xlu0 %v1117, 16
        %v1122 = vpop.permute.xlu0 %1121
        %1123 = vrot.lane.b32.xlu0 %v1118, 16
        %v1124 = vpop.permute.xlu0 %1123
        %1125 = vrot.lane.b32.xlu0 %v1119, 16
        %v1126 = vpop.permute.xlu0 %1125
        %1127 = vrot.lane.b32.xlu0 %v1120, 16
        %v1128 = vpop.permute.xlu0 %1127
        %v1129 = vunpack.c.l.b16 %v691
        %v1130 = vunpack.c.l.b16 %v695
        %v1131 = vunpack.c.l.b16 %v699
        %v1132 = vunpack.c.l.b16 %v703
        %v1133 = vunpack.c.l.b16 %v707
        %v1134 = vunpack.c.l.b16 %v711
        %v1135 = vunpack.c.l.b16 %v715
        %v1136 = vunpack.c.l.b16 %v719
        %v1137 = vpack.c.b16 %v1130, %v1129
        %v1138 = vpack.c.b16 %v1132, %v1131
        %v1139 = vpack.c.b16 %v1134, %v1133
        %v1140 = vpack.c.b16 %v1136, %v1135
        %1141 = vrot.lane.b32.xlu0 %v1137, 32
        %v1142 = vpop.permute.xlu0 %1141
        %1143 = vrot.lane.b32.xlu0 %v1138, 32
        %v1144 = vpop.permute.xlu0 %1143
        %1145 = vrot.lane.b32.xlu0 %v1139, 32
        %v1146 = vpop.permute.xlu0 %1145
        %1147 = vrot.lane.b32.xlu0 %v1140, 32
        %v1148 = vpop.permute.xlu0 %1147
        %v1157 = vunpack.c.l.b16 %v720
        %v1158 = vunpack.c.l.b16 %v721
        %v1159 = vunpack.c.l.b16 %v722
        %v1160 = vunpack.c.l.b16 %v723
        %v1161 = vunpack.c.l.b16 %v724
        %v1162 = vunpack.c.l.b16 %v725
        %v1163 = vunpack.c.l.b16 %v726
        %v1164 = vunpack.c.l.b16 %v727
        %v1165 = vpack.c.b16 %v1158, %v1157
        %v1166 = vpack.c.b16 %v1160, %v1159
        %v1167 = vpack.c.b16 %v1162, %v1161
        %v1168 = vpack.c.b16 %v1164, %v1163
        %1169 = vrot.lane.b32.xlu0 %v1165, 48
        %v1170 = vpop.permute.xlu0 %1169
        %1171 = vrot.lane.b32.xlu0 %v1166, 48
        %v1172 = vpop.permute.xlu0 %1171
        %1173 = vrot.lane.b32.xlu0 %v1167, 48
        %v1174 = vpop.permute.xlu0 %1173
        %1175 = vrot.lane.b32.xlu0 %v1168, 48
        %v1176 = vpop.permute.xlu0 %1175
        %v1177 = vunpack.c.l.b16 %v749
        %v1178 = vunpack.c.l.b16 %v763
        %v1179 = vunpack.c.l.b16 %v777
        %v1180 = vunpack.c.l.b16 %v791
        %v1181 = vunpack.c.l.b16 %v805
        %v1182 = vunpack.c.l.b16 %v819
        %v1183 = vunpack.c.l.b16 %v833
        %v1184 = vunpack.c.l.b16 %v847
        %v1185 = vpack.c.b16 %v1178, %v1177
        %v1186 = vpack.c.b16 %v1180, %v1179
        %v1187 = vpack.c.b16 %v1182, %v1181
        %v1188 = vpack.c.b16 %v1184, %v1183
        %1189 = vrot.lane.b32.xlu0 %v1185, 64
        %v1190 = vpop.permute.xlu0 %1189
        %1191 = vrot.lane.b32.xlu0 %v1186, 64
        %v1192 = vpop.permute.xlu0 %1191
        %1193 = vrot.lane.b32.xlu0 %v1187, 64
        %v1194 = vpop.permute.xlu0 %1193
        %1195 = vrot.lane.b32.xlu0 %v1188, 64
        %v1196 = vpop.permute.xlu0 %1195
        %v1197 = vunpack.c.l.b16 %v875
        %v1198 = vunpack.c.l.b16 %v879
        %v1199 = vunpack.c.l.b16 %v883
        %v1200 = vunpack.c.l.b16 %v887
        %v1201 = vunpack.c.l.b16 %v891
        %v1202 = vunpack.c.l.b16 %v895
        %v1203 = vunpack.c.l.b16 %v899
        %v1204 = vunpack.c.l.b16 %v903
        %v1205 = vpack.c.b16 %v1198, %v1197
        %v1206 = vpack.c.b16 %v1200, %v1199
        %v1207 = vpack.c.b16 %v1202, %v1201
        %v1208 = vpack.c.b16 %v1204, %v1203
        %1209 = vrot.lane.b32.xlu0 %v1205, 80
        %v1210 = vpop.permute.xlu0 %1209
        %1211 = vrot.lane.b32.xlu0 %v1206, 80
        %v1212 = vpop.permute.xlu0 %1211
        %1213 = vrot.lane.b32.xlu0 %v1207, 80
        %v1214 = vpop.permute.xlu0 %1213
        %1215 = vrot.lane.b32.xlu0 %v1208, 80
        %v1216 = vpop.permute.xlu0 %1215
        %v1225 = vunpack.c.l.b16 %v905
        %v1226 = vunpack.c.l.b16 %v906
        %v1227 = vunpack.c.l.b16 %v907
        %v1228 = vunpack.c.l.b16 %v908
        %v1229 = vunpack.c.l.b16 %v909
        %v1230 = vunpack.c.l.b16 %v910
        %v1231 = vunpack.c.l.b16 %v911
        %v1232 = vunpack.c.l.b16 %v912
        %v1233 = vpack.c.b16 %v1226, %v1225
        %v1234 = vpack.c.b16 %v1228, %v1227
        %v1235 = vpack.c.b16 %v1230, %v1229
        %v1236 = vpack.c.b16 %v1232, %v1231
        %1237 = vrot.lane.b32.xlu0 %v1233, 96
        %v1238 = vpop.permute.xlu0 %1237
        %1239 = vrot.lane.b32.xlu0 %v1234, 96
        %v1240 = vpop.permute.xlu0 %1239
        %1241 = vrot.lane.b32.xlu0 %v1235, 96
        %v1242 = vpop.permute.xlu0 %1241
        %1243 = vrot.lane.b32.xlu0 %v1236, 96
        %v1244 = vpop.permute.xlu0 %1243
        %v1245 = vunpack.c.l.b16 %v934
        %v1246 = vunpack.c.l.b16 %v948
        %v1247 = vunpack.c.l.b16 %v962
        %v1248 = vunpack.c.l.b16 %v976
        %v1249 = vunpack.c.l.b16 %v990
        %v1250 = vunpack.c.l.b16 %v1004
        %v1251 = vunpack.c.l.b16 %v1018
        %v1252 = vunpack.c.l.b16 %v1032
        %v1253 = vpack.c.b16 %v1246, %v1245
        %v1254 = vpack.c.b16 %v1248, %v1247
        %v1255 = vpack.c.b16 %v1250, %v1249
        %v1256 = vpack.c.b16 %v1252, %v1251
        %1257 = vrot.lane.b32.xlu0 %v1253, 112
        %v1258 = vpop.permute.xlu0 %1257
        %1259 = vrot.lane.b32.xlu0 %v1254, 112
        %v1260 = vpop.permute.xlu0 %1259
        %1261 = vrot.lane.b32.xlu0 %v1255, 112
        %v1262 = vpop.permute.xlu0 %1261
        %1263 = vrot.lane.b32.xlu0 %v1256, 112
        %v1264 = vpop.permute.xlu0 %1263
        %v1265 = vunpack.c.l.b16 %v1060
        %v1266 = vunpack.c.l.b16 %v1064
        %v1267 = vunpack.c.l.b16 %v1068
        %v1268 = vunpack.c.l.b16 %v1072
        %v1269 = vunpack.c.l.b16 %v1076
        %v1270 = vunpack.c.l.b16 %v1080
        %v1271 = vunpack.c.l.b16 %v1084
        %v1272 = vunpack.c.l.b16 %v1088
        %v1273 = vpack.c.b16 %v1266, %v1265
        %v1274 = vpack.c.b16 %v1268, %v1267
        %v1275 = vpack.c.b16 %v1270, %v1269
        %v1276 = vpack.c.b16 %v1272, %v1271
        %vm1277 = vcmask 130048
        %v1280 = vsel %vm1277, %v1105, %v1122
        %v1283 = vsel %vm1277, %v1106, %v1124
        %v1286 = vsel %vm1277, %v1107, %v1126
        %v1289 = vsel %vm1277, %v1108, %v1128
        %vm1290 = vcmask 261120
        %v1292 = vsel %vm1290, %v1280, %v1142
        %v1294 = vsel %vm1290, %v1283, %v1144
        %v1296 = vsel %vm1290, %v1286, %v1146
        %v1298 = vsel %vm1290, %v1289, %v1148
        %vm1299 = vcmask 392192
        %v1301 = vsel %vm1299, %v1292, %v1170
        %v1303 = vsel %vm1299, %v1294, %v1172
        %v1305 = vsel %vm1299, %v1296, %v1174
        %v1307 = vsel %vm1299, %v1298, %v1176
        %vm1308 = vcmask 523264
        %v1310 = vsel %vm1308, %v1301, %v1190
        %v1312 = vsel %vm1308, %v1303, %v1192
        %v1314 = vsel %vm1308, %v1305, %v1194
        %v1316 = vsel %vm1308, %v1307, %v1196
        %vm1317 = vcmask 654336
        %v1319 = vsel %vm1317, %v1310, %v1210
        %v1321 = vsel %vm1317, %v1312, %v1212
        %v1323 = vsel %vm1317, %v1314, %v1214
        %v1325 = vsel %vm1317, %v1316, %v1216
        %vm1326 = vcmask 785408
        %v1328 = vsel %vm1326, %v1319, %v1238
        %v1330 = vsel %vm1326, %v1321, %v1240
        %v1332 = vsel %vm1326, %v1323, %v1242
        %v1334 = vsel %vm1326, %v1325, %v1244
        %vm1335 = vcmask 916480
        %v1337 = vsel %vm1335, %v1328, %v1258
        %v1340 = vsel %vm1335, %v1330, %v1260
        %v1343 = vsel %vm1335, %v1332, %v1262
        %v1346 = vsel %vm1335, %v1334, %v1264
        %v1348 = vld [vmem:[%s306] sm:$0xf]
        %v1349 = vld [vmem:[%s306 + $0x4] sm:$0xf]
        %v1350 = vld [vmem:[%s306 + $0x8] sm:$0xf]
        %v1351 = vld [vmem:[%s306 + $0xc] sm:$0xf]
        %v1352 = vld [vmem:[%s306 + $0x10] sm:$0xf]
        %v1353 = vld [vmem:[%s306 + $0x14] sm:$0xf]
        %v1354 = vld [vmem:[%s306 + $0x18] sm:$0xf]
        %v1355 = vld [vmem:[%s306 + $0x1c] sm:$0xf]
        %v1356 = vld [vmem:[%s306 + $0x20] sm:$0xf]
        %v1357 = vld [vmem:[%s306 + $0x24] sm:$0xf]
        %v1358 = vld [vmem:[%s306 + $0x28] sm:$0xf]
        %v1359 = vld [vmem:[%s306 + $0x2c] sm:$0xf]
        %v1360 = vld [vmem:[%s306 + $0x30] sm:$0xf]
        %v1361 = vld [vmem:[%s306 + $0x34] sm:$0xf]
        %v1362 = vld [vmem:[%s306 + $0x38] sm:$0xf]
        %v1363 = vld [vmem:[%s306 + $0x3c] sm:$0xf]
        %v1364 = vld [vmem:[%s306 + $0x40] sm:$0xf]
        %v1365 = vld [vmem:[%s306 + $0x44] sm:$0xf]
        %v1384 = vunpack.c.l.b16 %v1348
        %v1385 = vunpack.c.l.b16 %v1349
        %v1386 = vunpack.c.l.b16 %v1350
        %v1387 = vunpack.c.l.b16 %v1351
        %v1388 = vunpack.c.l.b16 %v1352
        %v1389 = vunpack.c.l.b16 %v1353
        %v1390 = vunpack.c.l.b16 %v1354
        %v1391 = vunpack.c.l.b16 %v1355
        %v1392 = vunpack.c.l.b16 %v1356
        %v1393 = vunpack.c.l.b16 %v1357
        %v1394 = vunpack.c.l.b16 %v1358
        %v1395 = vunpack.c.l.b16 %v1359
        %v1396 = vunpack.c.l.b16 %v1360
        %v1397 = vunpack.c.l.b16 %v1361
        %v1398 = vunpack.c.l.b16 %v1362
        %v1399 = vunpack.c.l.b16 %v1363
        %v1400 = vunpack.c.l.b16 %v1364
        %v1401 = vunpack.c.l.b16 %v1365
        %v1402 = vpack.c.b16 %v1385, %v1384
        %v1403 = vpack.c.b16 %v1387, %v1386
        %v1404 = vpack.c.b16 %v1389, %v1388
        %v1405 = vpack.c.b16 %v1391, %v1390
        %v1406 = vpack.c.b16 %v1393, %v1392
        %v1407 = vpack.c.b16 %v1395, %v1394
        %v1408 = vpack.c.b16 %v1397, %v1396
        %v1409 = vpack.c.b16 %v1399, %v1398
        %v1410 = vpack.c.b16 %v1401, %v1400
        %v1421 = vsel %vm1277, %v1273, 0
        %v1424 = vsel %vm1277, %v1274, 0
        %v1427 = vsel %vm1277, %v1275, 0
        %v1430 = vsel %vm1277, %v1276, 0
        %1432 = vmatprep.subr.bf16.mxu0 0
        %1433 = vmatpush1.bf16.msra.mxu0 %v1402
        %1434 = vmatprep.subr.bf16.mxu0 0
        %1435 = vmatpush1.bf16.msra.mxu0 %v1403
        %1436 = vmatprep.subr.bf16.mxu0 0
        %1437 = vmatpush1.bf16.msra.mxu0 %v1404
        %1438 = vmatprep.subr.bf16.mxu0 0
        %1439 = vmatpush1.bf16.msra.mxu0 %v1405
        %1440 = vmatprep.subr.bf16.mxu0 0
        %1441 = vmatpush1.bf16.msra.mxu0 %v1406
        %1442 = vmatprep.subr.bf16.mxu0 0
        %1443 = vmatpush1.bf16.msra.mxu0 %v1407
        %1444 = vmatprep.subr.bf16.mxu0 0
        %1445 = vmatpush1.bf16.msra.mxu0 %v1408
        %1446 = vmatprep.subr.bf16.mxu0 0
        %1447 = vmatpush1.bf16.msra.mxu0 %v1409
        %1448 = vmatprep.subr.bf16.mxu0 0
        %1449 = vmatpush1.bf16.msra.mxu0 %v1410
        %1450 = vmatprep.subr.bf16.mxu0 0
        %1451 = vmatpush1.bf16.msra.mxu0 0
        %1452 = vmatprep.subr.bf16.mxu0 0
        %1453 = vmatpush1.bf16.msra.mxu0 0
        %1454 = vmatprep.subr.bf16.mxu0 0
        %1455 = vmatpush1.bf16.msra.mxu0 0
        %1456 = vmatprep.subr.bf16.mxu0 0
        %1457 = vmatpush1.bf16.msra.mxu0 0
        %1458 = vmatprep.subr.bf16.mxu0 0
        %1459 = vmatpush1.bf16.msra.mxu0 0
        %1460 = vmatprep.subr.bf16.mxu0 0
        %1461 = vmatpush1.bf16.msra.mxu0 0
        %1462 = vmatprep.subr.bf16.mxu0 0
        %1463 = vmatpush1.bf16.msra.mxu0 0
        %1464 = vmatprep.mubr.bf16.mxu0 %v1421
        %1465 = vmatmul.mubr.bf16.gmra.mrb[0].mxu0 %v1337
        %v1466 = vpop.f32.mrb[0].mxu0
        %v1467 = vadd.f32 0.0, %v1466
        %v1468 = vpop.f32.mrb[0].mxu0
        %v1469 = vpop.f32.mrb[0].mxu0
        %v1470 = vadd.f32 0.0, %v1469
        %v1471 = vpop.f32.mrb[0].mxu0
        %1472 = vmatprep.mubr.bf16.mxu0 %v1424
        %1473 = vmatmul.mubr.bf16.gmra.mrb[0].mxu0 %v1340
        %v1474 = vpop.f32.mrb[0].mxu0
        %v1475 = vadd.f32 0.0, %v1474
        %v1476 = vpop.f32.mrb[0].mxu0
        %v1477 = vpop.f32.mrb[0].mxu0
        %v1478 = vadd.f32 0.0, %v1477
        %v1479 = vpop.f32.mrb[0].mxu0
        %1480 = vmatprep.mubr.bf16.mxu0 %v1427
        %1481 = vmatmul.mubr.bf16.gmra.mrb[0].mxu0 %v1343
        %v1482 = vpop.f32.mrb[0].mxu0
        %v1483 = vadd.f32 0.0, %v1482
        %v1484 = vpop.f32.mrb[0].mxu0
        %v1485 = vpop.f32.mrb[0].mxu0
        %v1486 = vadd.f32 0.0, %v1485
        %v1487 = vpop.f32.mrb[0].mxu0
        %1488 = vmatprep.mubr.bf16.mxu0 %v1430
        %1489 = vmatmul.mubr.bf16.gmra.mrb[0].mxu0 %v1346
        %v1490 = vpop.f32.mrb[0].mxu0
        %v1491 = vadd.f32 0.0, %v1490
        %v1492 = vpop.f32.mrb[0].mxu0
        %v1493 = vpop.f32.mrb[0].mxu0
        %v1494 = vadd.f32 0.0, %v1493
        %v1495 = vpop.f32.mrb[0].mxu0
        %1496 = vdwg.mxu0
        %v1497 = vld [vmem:[%s360] sm:$0x1]
        %v1499 = vlaneseq
        %v1500 = vshrl.u32 %v1499, 7
        %v1501 = vsub.s32 0, %v1500
        %v1502 = vrot.slane %v1497, %v1501
        %v1504 = vmul.f32 %v1467, %v1502
        %v1505 = vmul.f32 %v1470, %v1502
        %v1506 = vmul.f32 %v1475, %v1502
        %v1507 = vmul.f32 %v1478, %v1502
        %v1508 = vmul.f32 %v1483, %v1502
        %v1509 = vmul.f32 %v1486, %v1502
        %v1510 = vmul.f32 %v1491, %v1502
        %v1511 = vmul.f32 %v1494, %v1502
        %v1512 = vld [vmem:[%s363] sm:$0x1]
        %v1514 = vlaneseq
        %v1515 = vshrl.u32 %v1514, 7
        %v1516 = vsub.s32 0, %v1515
        %v1517 = vrot.slane %v1512, %v1516
        %v1519 = vadd.f32 %v1504, %v1517
        %v1520 = vadd.f32 %v1505, %v1517
        %v1521 = vadd.f32 %v1506, %v1517
        %v1522 = vadd.f32 %v1507, %v1517
        %v1523 = vadd.f32 %v1508, %v1517
        %v1524 = vadd.f32 %v1509, %v1517
        %v1525 = vadd.f32 %v1510, %v1517
        %v1526 = vadd.f32 %v1511, %v1517
        %v1527 = vld [vmem:[%s315] sm:$0xf]
        %v1528 = vld [vmem:[%s315 + $0x4] sm:$0xf]
        %v1529 = vld [vmem:[%s315 + $0x8] sm:$0xf]
        %v1530 = vld [vmem:[%s315 + $0xc] sm:$0xf]
        %v1531 = vld [vmem:[%s315 + $0x10] sm:$0xf]
        %v1532 = vld [vmem:[%s315 + $0x14] sm:$0xf]
        %v1533 = vld [vmem:[%s315 + $0x18] sm:$0xf]
        %v1534 = vld [vmem:[%s315 + $0x1c] sm:$0xf]
        %v1535 = vunpack.c.l.bf16 %v1527
        %v1536 = vunpack.c.l.bf16 %v1528
        %v1537 = vunpack.c.l.bf16 %v1529
        %v1538 = vunpack.c.l.bf16 %v1530
        %v1539 = vunpack.c.l.bf16 %v1531
        %v1540 = vunpack.c.l.bf16 %v1532
        %v1541 = vunpack.c.l.bf16 %v1533
        %v1542 = vunpack.c.l.bf16 %v1534
        %v1543 = vadd.f32 %v1519, %v1535
        %v1544 = vadd.f32 %v1520, %v1536
        %v1545 = vadd.f32 %v1521, %v1537
        %v1546 = vadd.f32 %v1522, %v1538
        %v1547 = vadd.f32 %v1523, %v1539
        %v1548 = vadd.f32 %v1524, %v1540
        %v1549 = vadd.f32 %v1525, %v1541
        %v1550 = vadd.f32 %v1526, %v1542
        %v1551 = vmax.f32 %v1543, 0.0
        %v1552 = vmax.f32 %v1544, 0.0
        %v1553 = vmax.f32 %v1545, 0.0
        %v1554 = vmax.f32 %v1546, 0.0
        %v1555 = vmax.f32 %v1547, 0.0
        %v1556 = vmax.f32 %v1548, 0.0
        %v1557 = vmax.f32 %v1549, 0.0
        %v1558 = vmax.f32 %v1550, 0.0
        %1559 = vst [vmem:[%s357] sm:$0xff] %v1551
        %1560 = vst [vmem:[%s357 + $0x8] sm:$0xff] %v1552
        %1561 = vst [vmem:[%s357 + $0x10] sm:$0xff] %v1553
        %1562 = vst [vmem:[%s357 + $0x18] sm:$0xff] %v1554
        %1563 = vst [vmem:[%s357 + $0x20] sm:$0xff] %v1555
        %1564 = vst [vmem:[%s357 + $0x28] sm:$0xff] %v1556
        %1565 = vst [vmem:[%s357 + $0x30] sm:$0xff] %v1557
        %1566 = vst [vmem:[%s357 + $0x38] sm:$0xff] %v1558
        %s1567 = sand.u32 %s179, 1
        %s1568 = scalar_lea.sflag [#allocation5], %s1567
        %s1569 = sand.u32 %s179, 1
        %s1570 = smul.addr %s1569, 64
        %s1571 = scalar_lea.vmem [#allocation9], %s1570
        // Predicated region
        $region53: #{tpu_custom_call.1} parent=39 // pred_check
          %p1572 = pneg %p189
        $region54: #{tpu_custom_call.1} parent=39 // pred_check_branch
          %1574 = sbr.rel (%p1572) target = $region56
        $region55: #{tpu_custom_call.1} parent=39 // pred_region
          %s1576 = ssub.s32 1024, 1024
          %1577 = vsyncadd %s1568, %s1576
          %s1578 = smul.addr %s29, 16
          %s1579 = sadd.s32 %s30, %s1578
          %s1580 = smul.addr %s1579, 128
          %s1581 = scalar_lea.hbm %s5, %s1580
          %s1582 = sshll.u32 %s1571, 4
          %s1583 = int_to_ptr.vmem [resolvable:$true] %s1582
          %1588 = dma.vmem_to_hbm [thread:$0]  %s1583, 1024, %s1581, %s1568, 128, 256, 8
        $region56: #{tpu_custom_call.1} parent=39 // pred_fallthru
          _
      $region40: #{tpu_custom_call.1} parent=5 // pred_fallthru
        _
      %p1589 = scmp.le.s32.totalorder 2, %s20
      // Predicated region
      $region57: #{tpu_custom_call.1} parent=5 // pred_check
        %p1590 = pneg %p1589
      $region58: #{tpu_custom_call.1} parent=5 // pred_check_branch
        %1592 = sbr.rel (%p1590) target = $region60
      $region59: #{tpu_custom_call.1} parent=5 // pred_region
        %s1593 = ssub.s32 %s20, 2
        // Predicated region
        $region61: #{tpu_custom_call.1} parent=59 // pred_check
          %p1594 = pneg %p195
        $region62: #{tpu_custom_call.1} parent=59 // pred_check_branch
          %1596 = sbr.rel (%p1594) target = $region64
        $region63: #{tpu_custom_call.1} parent=59 // pred_region
          %s1597 = sand.u32 %s180, 1
          %s1598 = scalar_lea.sflag [#allocation5], %s1597
          %s1599 = sand.u32 %s180, 1
          %s1600 = smul.addr %s1599, 64
          %s1601 = scalar_lea.vmem [#allocation9], %s1600
          %1602 = dma.done %s1598, 1024
        $region64: #{tpu_custom_call.1} parent=59 // pred_fallthru
          _
      $region60: #{tpu_custom_call.1} parent=5 // pred_fallthru
        _
    $region6: #{tpu_custom_call.1} parent=1 // loop_footer
      %s24 = sadd.s32 1, %s20
    $region7: #{tpu_custom_call.1} parent=1 // loop_footer_branch
      %19 = sbr.rel target = $region3
    $region8: #{tpu_custom_call.1} parent=1 // loop_exit
      _
    %1603 = vsyncpa [#allocation4], 1
    %s1604 = scalar_lea.sflag [#allocation4], 1
    %1605 = vsyncpa %s1604, 1
    %1606 = vsyncpa [#allocation7], 1
    %s1607 = scalar_lea.sflag [#allocation7], 1
    %1608 = vsyncpa %s1607, 1
    %1609 = vsyncpa [#allocation5], 1
    %s1610 = scalar_lea.sflag [#allocation5], 1
    %1611 = vsyncpa %s1610, 1

</llo_original>
